<compile_context>
chip_gen: v5e
topology: v5e:2x2
jax: 0.10.0
libtpu: 0.0.40
codegen_flags: <defaults>
</compile_context>

<pallas_src>
import functools

import jax
import jax.numpy as jnp
from jax.experimental import pallas as pl
from jax.experimental.pallas import tpu as pltpu

HIDDEN = 64
INPUT = 14    # len(selected_features)
OUTPUT = 14   # len(selected_features)
NUM_LAYERS = 2


def _lstm_fc_kernel(x_ref,          # (T*B, Dp)  time-major, flattened, f32
                    wih0_ref,       # (Dp, 4H)   layer-0 input weights (f32 or bf16)
                    whh0_ref,       # (H, 4H)    layer-0 recurrent weights, f32
                    b0_ref,         # (1, 4H)    fused b_ih0 + b_hh0, f32
                    wih1_ref,       # (H, 4H)    layer-1 input weights, f32
                    whh1_ref,       # (H, 4H)    layer-1 recurrent weights, f32
                    b1_ref,         # (1, 4H)    fused b_ih1 + b_hh1, f32
                    wfc_ref,        # (H, O)     output head, f32
                    bfc_ref,        # (1, O)
                    out_ref,        # (B, O)
                    *, batch):
    B = batch
    T = x_ref.shape[0] // B
    H = whh0_ref.shape[0]
    proj_dtype = wih0_ref.dtype

    # ---- Off-chain precompute: all T layer-0 input projections in ONE matmul,
    # with the layer-0 bias folded in.  (T*B, Dp) @ (Dp, 4H) -> (T*B, 4H) f32.
    xproj = (jnp.dot(x_ref[...].astype(proj_dtype), wih0_ref[...],
                     preferred_element_type=jnp.float32)
             + b0_ref[...])

    # Hoisted layer-1 bias broadcast (done once, not per unrolled step).
    b1b = jnp.broadcast_to(b1_ref[...], (B, 4 * H))

    def gates_to_hc(gates, c):
        # Columns were permuted [i,f,g,o] -> [i,f,o,g] at weight-prep time:
        # one contiguous sigmoid over 3H lanes, one tanh over H lanes.
        sig = jax.nn.sigmoid(gates[:, :3 * H])
        i = sig[:, 0 * H:1 * H]
        f = sig[:, 1 * H:2 * H]
        o = sig[:, 2 * H:3 * H]
        g = jnp.tanh(gates[:, 3 * H:])
        c_new = f * c + i * g
        h_new = o * jnp.tanh(c_new)
        return h_new, c_new

    zeros = jnp.zeros((B, H), jnp.float32)
    h0, c0, h1, c1 = zeros, zeros, zeros, zeros

    # Fully unrolled recurrence with static indices (T is small).  For large T
    # switch to lax.fori_loop(..., unroll=2..4) to bound instruction memory.
    for t in range(T):
        # Layer 0: recurrent K=64 dot + precomputed input projection (static slice).
        g0 = (jnp.dot(h0, whh0_ref[...], preferred_element_type=jnp.float32)
              + xproj[t * B:(t + 1) * B, :])
        h0, c0 = gates_to_hc(g0, c0)
        # Layer 1: two K=64 dots; h1 @ W_hh1 only depends on the previous step,
        # so it overlaps with the fresh-h0 chain.
        g1 = (jnp.dot(h0, wih1_ref[...], preferred_element_type=jnp.float32)
              + jnp.dot(h1, whh1_ref[...], preferred_element_type=jnp.float32)
              + b1b)
        h1, c1 = gates_to_hc(g1, c1)

    # Output head on the last timestep's top-layer hidden state (one-off, f32).
    out_ref[...] = (jnp.dot(h1, wfc_ref[...], preferred_element_type=jnp.float32)
                    + bfc_ref[...])


def prepare_params(params, *, input_proj_dtype=jnp.float32, pad_input_to=64):
    """One-time weight prep: gate permutation [i,f,g,o]->[i,f,o,g], zero-pad of
    the layer-0 input-weight rows to a clean contraction dim (matches the
    zero-padded x columns), and an optional cast of ONLY the input-projection
    weight to bf16.  Recurrent weights, biases and the FC head stay f32."""
    wih0, whh0, b0, wih1, whh1, b1, wfc, bfc = params
    D = wih0.shape[0]
    H = whh0.shape[0]
    Dp = max(pad_input_to, D)

    perm = jnp.concatenate([
        jnp.arange(0, H),                 # i
        jnp.arange(H, 2 * H),             # f
        jnp.arange(3 * H, 4 * H),         # o
        jnp.arange(2 * H, 3 * H),         # g
    ])

    wih0p = jnp.zeros((Dp, 4 * H), jnp.float32).at[:D].set(wih0)
    wih0p = wih0p[:, perm].astype(input_proj_dtype)
    whh0p = whh0[:, perm].astype(jnp.float32)
    wih1p = wih1[:, perm].astype(jnp.float32)
    whh1p = whh1[:, perm].astype(jnp.float32)
    b0p = b0[:, perm].astype(jnp.float32)
    b1p = b1[:, perm].astype(jnp.float32)
    return (wih0p, whh0p, b0p, wih1p, whh1p, b1p,
            wfc.astype(jnp.float32), bfc.astype(jnp.float32))


def multi_output_lstm(x_btd, fused_params):
    """x_btd: (B, T, D) float32 (batch_first, like the PyTorch module)."""
    wih0, whh0, b0, wih1, whh1, b1, wfc, bfc = fused_params
    B, T, D = x_btd.shape
    Dp = wih0.shape[0]
    H, O = wfc.shape

    # Time-major + flatten so the layer-0 input projection is a single matmul;
    # the zero-pad D -> Dp matches the zero rows appended to W_ih0.  These are
    # one-off ops that stay fused under the caller's jit (off the recurrent chain).
    x_t = jnp.transpose(x_btd.astype(jnp.float32), (1, 0, 2)).reshape(T * B, D)
    x_flat = jnp.zeros((T * B, Dp), jnp.float32).at[:, :D].set(x_t)

    vmem = pl.BlockSpec(memory_space=pltpu.MemorySpace.VMEM)
    kernel = functools.partial(_lstm_fc_kernel, batch=B)
    return pl.pallas_call(
        kernel,
        out_shape=jax.ShapeDtypeStruct((B, O), jnp.float32),
        in_specs=[vmem] * 9,
        out_specs=vmem,
    )(x_flat, wih0, whh0, b0, wih1, whh1, b1, wfc, bfc)


def init_params(key):
    """Deterministic init mimicking PyTorch's U(-1/sqrt(H), 1/sqrt(H)).
    Raw (unfused) layout, gate order [i, f, g, o] like nn.LSTM."""
    H, D, O = HIDDEN, INPUT, OUTPUT
    k = 1.0 / jnp.sqrt(jnp.float32(H))
    keys = jax.random.split(key, 10)
    u = lambda kk, shape: jax.random.uniform(kk, shape, jnp.float32, -k, k)

    wih0 = u(keys[0], (D, 4 * H))
    whh0 = u(keys[1], (H, 4 * H))
    b0 = u(keys[2], (1, 4 * H)) + u(keys[3], (1, 4 * H))   # b_ih + b_hh
    wih1 = u(keys[4], (H, 4 * H))
    whh1 = u(keys[5], (H, 4 * H))
    b1 = u(keys[6], (1, 4 * H)) + u(keys[7], (1, 4 * H))
    wfc = jax.random.uniform(keys[8], (H, O), jnp.float32, -k, k)
    bfc = jax.random.uniform(keys[9], (1, O), jnp.float32, -k, k)
    return (wih0, whh0, b0, wih1, whh1, b1, wfc, bfc)


def reference(x_btd, params):
    """Pure-JAX reference of the PyTorch forward (lax.scan LSTM, f32)."""
    wih0, whh0, b0, wih1, whh1, b1, wfc, bfc = params
    B, T, D = x_btd.shape
    H = HIDDEN

    def cell(h, c, inp, wih, whh, b):
        gates = inp @ wih + h @ whh + b
        i = jax.nn.sigmoid(gates[:, :H])
        f = jax.nn.sigmoid(gates[:, H:2 * H])
        g = jnp.tanh(gates[:, 2 * H:3 * H])
        o = jax.nn.sigmoid(gates[:, 3 * H:])
        c = f * c + i * g
        h = o * jnp.tanh(c)
        return h, c

    def step(carry, xt):
        h0, c0, h1, c1 = carry
        h0, c0 = cell(h0, c0, xt, wih0, whh0, b0)
        h1, c1 = cell(h1, c1, h0, wih1, whh1, b1)
        return (h0, c0, h1, c1), h1

    init = tuple(jnp.zeros((B, H), jnp.float32) for _ in range(4))
    _, ys = jax.lax.scan(step, init, jnp.swapaxes(x_btd, 0, 1))
    return ys[-1] @ wfc + bfc


if __name__ == "__main__":
    key = jax.random.PRNGKey(0)
    kx, kp = jax.random.split(key)

    B, T, D = 2, 8, INPUT                       # (batch, seq_len, features)
    x = jax.random.normal(kx, (B, T, D), jnp.float32)
    params = init_params(kp)
    ref = reference(x, params)

    run = jax.jit(multi_output_lstm)

    # Exact f32 path (validates gate permutation, fused bias, hoisted projection).
    fused_f32 = prepare_params(params)
    out = jax.block_until_ready(run(x, fused_f32))
    assert out.shape == (B, OUTPUT)
    assert jnp.allclose(out, ref, atol=1e-4, rtol=1e-4), "f32 mismatch vs reference"

    # bf16 restricted to the one-off input-projection operands (f32 accumulate);
    # the recurrence and FC head stay f32, so drift does not compound over T.
    fused_bf16 = prepare_params(params, input_proj_dtype=jnp.bfloat16)
    out_bf16 = jax.block_until_ready(run(x, fused_bf16))
    assert out_bf16.shape == (B, OUTPUT)
    assert jnp.allclose(out_bf16, ref, atol=5e-2, rtol=5e-2), "bf16 mismatch vs reference"

    print("KERNEL_OK")
</pallas_src>

<mosaic_0001>
module attributes {stable_mosaic.version = 11 : i64} {
  func.func @_lstm_fc_kernel(%arg0: memref<16x64xf32, #tpu.memory_space<vmem>>, %arg1: memref<64x256xf32, #tpu.memory_space<vmem>>, %arg2: memref<64x256xf32, #tpu.memory_space<vmem>>, %arg3: memref<1x256xf32, #tpu.memory_space<vmem>>, %arg4: memref<64x256xf32, #tpu.memory_space<vmem>>, %arg5: memref<64x256xf32, #tpu.memory_space<vmem>>, %arg6: memref<1x256xf32, #tpu.memory_space<vmem>>, %arg7: memref<64x14xf32, #tpu.memory_space<vmem>>, %arg8: memref<1x14xf32, #tpu.memory_space<vmem>>, %arg9: memref<2x14xf32, #tpu.memory_space<vmem>>) attributes {dimension_semantics = [], scalar_prefetch = 0 : i64, scratch_operands = 0 : i64, tpu.core_type = #tpu.core_type<tc>} {
    %c0 = arith.constant 0 : index
    %c0_0 = arith.constant 0 : index
    %0 = vector.load %arg0[%c0, %c0_0] : memref<16x64xf32, #tpu.memory_space<vmem>>, vector<16x64xf32>
    %c0_1 = arith.constant 0 : index
    %c0_2 = arith.constant 0 : index
    %1 = vector.load %arg1[%c0_1, %c0_2] : memref<64x256xf32, #tpu.memory_space<vmem>>, vector<64x256xf32>
    %cst = arith.constant dense<0.000000e+00> : vector<16x256xf32>
    %2 = tpu.matmul %0, %1, %cst {dimension_numbers = #tpu.dot_dimension_numbers<[1], [0], [0], [1], [0, 0, 1, 1], [], []>} : vector<16x64xf32>, vector<64x256xf32>, vector<16x256xf32> -> vector<16x256xf32>
    %c0_3 = arith.constant 0 : index
    %c0_4 = arith.constant 0 : index
    %3 = vector.load %arg3[%c0_3, %c0_4] : memref<1x256xf32, #tpu.memory_space<vmem>>, vector<1x256xf32>
    %4 = vector.broadcast %3 : vector<1x256xf32> to vector<16x256xf32>
    %5 = arith.addf %2, %4 : vector<16x256xf32>
    %c0_5 = arith.constant 0 : index
    %c0_6 = arith.constant 0 : index
    %6 = vector.load %arg6[%c0_5, %c0_6] : memref<1x256xf32, #tpu.memory_space<vmem>>, vector<1x256xf32>
    %7 = vector.shape_cast %6 : vector<1x256xf32> to vector<1x256xf32>
    %8 = vector.broadcast %7 : vector<1x256xf32> to vector<2x256xf32>
    %cst_7 = arith.constant 0.000000e+00 : f32
    %9 = vector.broadcast %cst_7 : f32 to vector<2x64xf32>
    %c0_8 = arith.constant 0 : index
    %c0_9 = arith.constant 0 : index
    %10 = vector.load %arg2[%c0_8, %c0_9] : memref<64x256xf32, #tpu.memory_space<vmem>>, vector<64x256xf32>
    %cst_10 = arith.constant dense<0.000000e+00> : vector<2x256xf32>
    %11 = tpu.matmul %9, %10, %cst_10 {dimension_numbers = #tpu.dot_dimension_numbers<[1], [0], [0], [1], [0, 0, 1, 1], [], []>} : vector<2x64xf32>, vector<64x256xf32>, vector<2x256xf32> -> vector<2x256xf32>
    %12 = vector.extract_strided_slice %5 {offsets = [0, 0], sizes = [2, 256], strides = [1, 1]} : vector<16x256xf32> to vector<2x256xf32>
    %13 = arith.addf %11, %12 : vector<2x256xf32>
    %14 = vector.extract_strided_slice %13 {offsets = [0, 0], sizes = [2, 192], strides = [1, 1]} : vector<2x256xf32> to vector<2x192xf32>
    %15 = arith.negf %14 : vector<2x192xf32>
    %16 = math.exp %15 : vector<2x192xf32>
    %cst_11 = arith.constant 1.000000e+00 : f32
    %17 = vector.broadcast %cst_11 : f32 to vector<2x192xf32>
    %18 = arith.addf %17, %16 : vector<2x192xf32>
    %19 = arith.divf %17, %18 : vector<2x192xf32>
    %20 = vector.extract_strided_slice %19 {offsets = [0, 0], sizes = [2, 64], strides = [1, 1]} : vector<2x192xf32> to vector<2x64xf32>
    %21 = vector.extract_strided_slice %19 {offsets = [0, 64], sizes = [2, 64], strides = [1, 1]} : vector<2x192xf32> to vector<2x64xf32>
    %22 = vector.extract_strided_slice %19 {offsets = [0, 128], sizes = [2, 64], strides = [1, 1]} : vector<2x192xf32> to vector<2x64xf32>
    %23 = vector.extract_strided_slice %13 {offsets = [0, 192], sizes = [2, 64], strides = [1, 1]} : vector<2x256xf32> to vector<2x64xf32>
    %24 = math.tanh %23 : vector<2x64xf32>
    %25 = arith.mulf %21, %9 : vector<2x64xf32>
    %26 = arith.mulf %20, %24 : vector<2x64xf32>
    %27 = arith.addf %25, %26 : vector<2x64xf32>
    %28 = math.tanh %27 : vector<2x64xf32>
    %29 = arith.mulf %22, %28 : vector<2x64xf32>
    %c0_12 = arith.constant 0 : index
    %c0_13 = arith.constant 0 : index
    %30 = vector.load %arg4[%c0_12, %c0_13] : memref<64x256xf32, #tpu.memory_space<vmem>>, vector<64x256xf32>
    %cst_14 = arith.constant dense<0.000000e+00> : vector<2x256xf32>
    %31 = tpu.matmul %29, %30, %cst_14 {dimension_numbers = #tpu.dot_dimension_numbers<[1], [0], [0], [1], [0, 0, 1, 1], [], []>} : vector<2x64xf32>, vector<64x256xf32>, vector<2x256xf32> -> vector<2x256xf32>
    %c0_15 = arith.constant 0 : index
    %c0_16 = arith.constant 0 : index
    %32 = vector.load %arg5[%c0_15, %c0_16] : memref<64x256xf32, #tpu.memory_space<vmem>>, vector<64x256xf32>
    %cst_17 = arith.constant dense<0.000000e+00> : vector<2x256xf32>
    %33 = tpu.matmul %9, %32, %cst_17 {dimension_numbers = #tpu.dot_dimension_numbers<[1], [0], [0], [1], [0, 0, 1, 1], [], []>} : vector<2x64xf32>, vector<64x256xf32>, vector<2x256xf32> -> vector<2x256xf32>
    %34 = arith.addf %31, %33 : vector<2x256xf32>
    %35 = arith.addf %34, %8 : vector<2x256xf32>
    %36 = vector.extract_strided_slice %35 {offsets = [0, 0], sizes = [2, 192], strides = [1, 1]} : vector<2x256xf32> to vector<2x192xf32>
    %37 = arith.negf %36 : vector<2x192xf32>
    %38 = math.exp %37 : vector<2x192xf32>
    %cst_18 = arith.constant 1.000000e+00 : f32
    %39 = vector.broadcast %cst_18 : f32 to vector<2x192xf32>
    %40 = arith.addf %39, %38 : vector<2x192xf32>
    %41 = arith.divf %39, %40 : vector<2x192xf32>
    %42 = vector.extract_strided_slice %41 {offsets = [0, 0], sizes = [2, 64], strides = [1, 1]} : vector<2x192xf32> to vector<2x64xf32>
    %43 = vector.extract_strided_slice %41 {offsets = [0, 64], sizes = [2, 64], strides = [1, 1]} : vector<2x192xf32> to vector<2x64xf32>
    %44 = vector.extract_strided_slice %41 {offsets = [0, 128], sizes = [2, 64], strides = [1, 1]} : vector<2x192xf32> to vector<2x64xf32>
    %45 = vector.extract_strided_slice %35 {offsets = [0, 192], sizes = [2, 64], strides = [1, 1]} : vector<2x256xf32> to vector<2x64xf32>
    %46 = math.tanh %45 : vector<2x64xf32>
    %47 = arith.mulf %43, %9 : vector<2x64xf32>
    %48 = arith.mulf %42, %46 : vector<2x64xf32>
    %49 = arith.addf %47, %48 : vector<2x64xf32>
    %50 = math.tanh %49 : vector<2x64xf32>
    %51 = arith.mulf %44, %50 : vector<2x64xf32>
    %c0_19 = arith.constant 0 : index
    %c0_20 = arith.constant 0 : index
    %52 = vector.load %arg2[%c0_19, %c0_20] : memref<64x256xf32, #tpu.memory_space<vmem>>, vector<64x256xf32>
    %cst_21 = arith.constant dense<0.000000e+00> : vector<2x256xf32>
    %53 = tpu.matmul %29, %52, %cst_21 {dimension_numbers = #tpu.dot_dimension_numbers<[1], [0], [0], [1], [0, 0, 1, 1], [], []>} : vector<2x64xf32>, vector<64x256xf32>, vector<2x256xf32> -> vector<2x256xf32>
    %54 = vector.extract_strided_slice %5 {offsets = [2, 0], sizes = [2, 256], strides = [1, 1]} : vector<16x256xf32> to vector<2x256xf32>
    %55 = arith.addf %53, %54 : vector<2x256xf32>
    %56 = vector.extract_strided_slice %55 {offsets = [0, 0], sizes = [2, 192], strides = [1, 1]} : vector<2x256xf32> to vector<2x192xf32>
    %57 = arith.negf %56 : vector<2x192xf32>
    %58 = math.exp %57 : vector<2x192xf32>
    %cst_22 = arith.constant 1.000000e+00 : f32
    %59 = vector.broadcast %cst_22 : f32 to vector<2x192xf32>
    %60 = arith.addf %59, %58 : vector<2x192xf32>
    %61 = arith.divf %59, %60 : vector<2x192xf32>
    %62 = vector.extract_strided_slice %61 {offsets = [0, 0], sizes = [2, 64], strides = [1, 1]} : vector<2x192xf32> to vector<2x64xf32>
    %63 = vector.extract_strided_slice %61 {offsets = [0, 64], sizes = [2, 64], strides = [1, 1]} : vector<2x192xf32> to vector<2x64xf32>
    %64 = vector.extract_strided_slice %61 {offsets = [0, 128], sizes = [2, 64], strides = [1, 1]} : vector<2x192xf32> to vector<2x64xf32>
    %65 = vector.extract_strided_slice %55 {offsets = [0, 192], sizes = [2, 64], strides = [1, 1]} : vector<2x256xf32> to vector<2x64xf32>
    %66 = math.tanh %65 : vector<2x64xf32>
    %67 = arith.mulf %63, %27 : vector<2x64xf32>
    %68 = arith.mulf %62, %66 : vector<2x64xf32>
    %69 = arith.addf %67, %68 : vector<2x64xf32>
    %70 = math.tanh %69 : vector<2x64xf32>
    %71 = arith.mulf %64, %70 : vector<2x64xf32>
    %c0_23 = arith.constant 0 : index
    %c0_24 = arith.constant 0 : index
    %72 = vector.load %arg4[%c0_23, %c0_24] : memref<64x256xf32, #tpu.memory_space<vmem>>, vector<64x256xf32>
    %cst_25 = arith.constant dense<0.000000e+00> : vector<2x256xf32>
    %73 = tpu.matmul %71, %72, %cst_25 {dimension_numbers = #tpu.dot_dimension_numbers<[1], [0], [0], [1], [0, 0, 1, 1], [], []>} : vector<2x64xf32>, vector<64x256xf32>, vector<2x256xf32> -> vector<2x256xf32>
    %c0_26 = arith.constant 0 : index
    %c0_27 = arith.constant 0 : index
    %74 = vector.load %arg5[%c0_26, %c0_27] : memref<64x256xf32, #tpu.memory_space<vmem>>, vector<64x256xf32>
    %cst_28 = arith.constant dense<0.000000e+00> : vector<2x256xf32>
    %75 = tpu.matmul %51, %74, %cst_28 {dimension_numbers = #tpu.dot_dimension_numbers<[1], [0], [0], [1], [0, 0, 1, 1], [], []>} : vector<2x64xf32>, vector<64x256xf32>, vector<2x256xf32> -> vector<2x256xf32>
    %76 = arith.addf %73, %75 : vector<2x256xf32>
    %77 = arith.addf %76, %8 : vector<2x256xf32>
    %78 = vector.extract_strided_slice %77 {offsets = [0, 0], sizes = [2, 192], strides = [1, 1]} : vector<2x256xf32> to vector<2x192xf32>
    %79 = arith.negf %78 : vector<2x192xf32>
    %80 = math.exp %79 : vector<2x192xf32>
    %cst_29 = arith.constant 1.000000e+00 : f32
    %81 = vector.broadcast %cst_29 : f32 to vector<2x192xf32>
    %82 = arith.addf %81, %80 : vector<2x192xf32>
    %83 = arith.divf %81, %82 : vector<2x192xf32>
    %84 = vector.extract_strided_slice %83 {offsets = [0, 0], sizes = [2, 64], strides = [1, 1]} : vector<2x192xf32> to vector<2x64xf32>
    %85 = vector.extract_strided_slice %83 {offsets = [0, 64], sizes = [2, 64], strides = [1, 1]} : vector<2x192xf32> to vector<2x64xf32>
    %86 = vector.extract_strided_slice %83 {offsets = [0, 128], sizes = [2, 64], strides = [1, 1]} : vector<2x192xf32> to vector<2x64xf32>
    %87 = vector.extract_strided_slice %77 {offsets = [0, 192], sizes = [2, 64], strides = [1, 1]} : vector<2x256xf32> to vector<2x64xf32>
    %88 = math.tanh %87 : vector<2x64xf32>
    %89 = arith.mulf %85, %49 : vector<2x64xf32>
    %90 = arith.mulf %84, %88 : vector<2x64xf32>
    %91 = arith.addf %89, %90 : vector<2x64xf32>
    %92 = math.tanh %91 : vector<2x64xf32>
    %93 = arith.mulf %86, %92 : vector<2x64xf32>
    %c0_30 = arith.constant 0 : index
    %c0_31 = arith.constant 0 : index
    %94 = vector.load %arg2[%c0_30, %c0_31] : memref<64x256xf32, #tpu.memory_space<vmem>>, vector<64x256xf32>
    %cst_32 = arith.constant dense<0.000000e+00> : vector<2x256xf32>
    %95 = tpu.matmul %71, %94, %cst_32 {dimension_numbers = #tpu.dot_dimension_numbers<[1], [0], [0], [1], [0, 0, 1, 1], [], []>} : vector<2x64xf32>, vector<64x256xf32>, vector<2x256xf32> -> vector<2x256xf32>
    %96 = vector.extract_strided_slice %5 {offsets = [4, 0], sizes = [2, 256], strides = [1, 1]} : vector<16x256xf32> to vector<2x256xf32>
    %97 = arith.addf %95, %96 : vector<2x256xf32>
    %98 = vector.extract_strided_slice %97 {offsets = [0, 0], sizes = [2, 192], strides = [1, 1]} : vector<2x256xf32> to vector<2x192xf32>
    %99 = arith.negf %98 : vector<2x192xf32>
    %100 = math.exp %99 : vector<2x192xf32>
    %cst_33 = arith.constant 1.000000e+00 : f32
    %101 = vector.broadcast %cst_33 : f32 to vector<2x192xf32>
    %102 = arith.addf %101, %100 : vector<2x192xf32>
    %103 = arith.divf %101, %102 : vector<2x192xf32>
    %104 = vector.extract_strided_slice %103 {offsets = [0, 0], sizes = [2, 64], strides = [1, 1]} : vector<2x192xf32> to vector<2x64xf32>
    %105 = vector.extract_strided_slice %103 {offsets = [0, 64], sizes = [2, 64], strides = [1, 1]} : vector<2x192xf32> to vector<2x64xf32>
    %106 = vector.extract_strided_slice %103 {offsets = [0, 128], sizes = [2, 64], strides = [1, 1]} : vector<2x192xf32> to vector<2x64xf32>
    %107 = vector.extract_strided_slice %97 {offsets = [0, 192], sizes = [2, 64], strides = [1, 1]} : vector<2x256xf32> to vector<2x64xf32>
    %108 = math.tanh %107 : vector<2x64xf32>
    %109 = arith.mulf %105, %69 : vector<2x64xf32>
    %110 = arith.mulf %104, %108 : vector<2x64xf32>
    %111 = arith.addf %109, %110 : vector<2x64xf32>
    %112 = math.tanh %111 : vector<2x64xf32>
    %113 = arith.mulf %106, %112 : vector<2x64xf32>
    %c0_34 = arith.constant 0 : index
    %c0_35 = arith.constant 0 : index
    %114 = vector.load %arg4[%c0_34, %c0_35] : memref<64x256xf32, #tpu.memory_space<vmem>>, vector<64x256xf32>
    %cst_36 = arith.constant dense<0.000000e+00> : vector<2x256xf32>
    %115 = tpu.matmul %113, %114, %cst_36 {dimension_numbers = #tpu.dot_dimension_numbers<[1], [0], [0], [1], [0, 0, 1, 1], [], []>} : vector<2x64xf32>, vector<64x256xf32>, vector<2x256xf32> -> vector<2x256xf32>
    %c0_37 = arith.constant 0 : index
    %c0_38 = arith.constant 0 : index
    %116 = vector.load %arg5[%c0_37, %c0_38] : memref<64x256xf32, #tpu.memory_space<vmem>>, vector<64x256xf32>
    %cst_39 = arith.constant dense<0.000000e+00> : vector<2x256xf32>
    %117 = tpu.matmul %93, %116, %cst_39 {dimension_numbers = #tpu.dot_dimension_numbers<[1], [0], [0], [1], [0, 0, 1, 1], [], []>} : vector<2x64xf32>, vector<64x256xf32>, vector<2x256xf32> -> vector<2x256xf32>
    %118 = arith.addf %115, %117 : vector<2x256xf32>
    %119 = arith.addf %118, %8 : vector<2x256xf32>
    %120 = vector.extract_strided_slice %119 {offsets = [0, 0], sizes = [2, 192], strides = [1, 1]} : vector<2x256xf32> to vector<2x192xf32>
    %121 = arith.negf %120 : vector<2x192xf32>
    %122 = math.exp %121 : vector<2x192xf32>
    %cst_40 = arith.constant 1.000000e+00 : f32
    %123 = vector.broadcast %cst_40 : f32 to vector<2x192xf32>
    %124 = arith.addf %123, %122 : vector<2x192xf32>
    %125 = arith.divf %123, %124 : vector<2x192xf32>
    %126 = vector.extract_strided_slice %125 {offsets = [0, 0], sizes = [2, 64], strides = [1, 1]} : vector<2x192xf32> to vector<2x64xf32>
    %127 = vector.extract_strided_slice %125 {offsets = [0, 64], sizes = [2, 64], strides = [1, 1]} : vector<2x192xf32> to vector<2x64xf32>
    %128 = vector.extract_strided_slice %125 {offsets = [0, 128], sizes = [2, 64], strides = [1, 1]} : vector<2x192xf32> to vector<2x64xf32>
    %129 = vector.extract_strided_slice %119 {offsets = [0, 192], sizes = [2, 64], strides = [1, 1]} : vector<2x256xf32> to vector<2x64xf32>
    %130 = math.tanh %129 : vector<2x64xf32>
    %131 = arith.mulf %127, %91 : vector<2x64xf32>
    %132 = arith.mulf %126, %130 : vector<2x64xf32>
    %133 = arith.addf %131, %132 : vector<2x64xf32>
    %134 = math.tanh %133 : vector<2x64xf32>
    %135 = arith.mulf %128, %134 : vector<2x64xf32>
    %c0_41 = arith.constant 0 : index
    %c0_42 = arith.constant 0 : index
    %136 = vector.load %arg2[%c0_41, %c0_42] : memref<64x256xf32, #tpu.memory_space<vmem>>, vector<64x256xf32>
    %cst_43 = arith.constant dense<0.000000e+00> : vector<2x256xf32>
    %137 = tpu.matmul %113, %136, %cst_43 {dimension_numbers = #tpu.dot_dimension_numbers<[1], [0], [0], [1], [0, 0, 1, 1], [], []>} : vector<2x64xf32>, vector<64x256xf32>, vector<2x256xf32> -> vector<2x256xf32>
    %138 = vector.extract_strided_slice %5 {offsets = [6, 0], sizes = [2, 256], strides = [1, 1]} : vector<16x256xf32> to vector<2x256xf32>
    %139 = arith.addf %137, %138 : vector<2x256xf32>
    %140 = vector.extract_strided_slice %139 {offsets = [0, 0], sizes = [2, 192], strides = [1, 1]} : vector<2x256xf32> to vector<2x192xf32>
    %141 = arith.negf %140 : vector<2x192xf32>
    %142 = math.exp %141 : vector<2x192xf32>
    %cst_44 = arith.constant 1.000000e+00 : f32
    %143 = vector.broadcast %cst_44 : f32 to vector<2x192xf32>
    %144 = arith.addf %143, %142 : vector<2x192xf32>
    %145 = arith.divf %143, %144 : vector<2x192xf32>
    %146 = vector.extract_strided_slice %145 {offsets = [0, 0], sizes = [2, 64], strides = [1, 1]} : vector<2x192xf32> to vector<2x64xf32>
    %147 = vector.extract_strided_slice %145 {offsets = [0, 64], sizes = [2, 64], strides = [1, 1]} : vector<2x192xf32> to vector<2x64xf32>
    %148 = vector.extract_strided_slice %145 {offsets = [0, 128], sizes = [2, 64], strides = [1, 1]} : vector<2x192xf32> to vector<2x64xf32>
    %149 = vector.extract_strided_slice %139 {offsets = [0, 192], sizes = [2, 64], strides = [1, 1]} : vector<2x256xf32> to vector<2x64xf32>
    %150 = math.tanh %149 : vector<2x64xf32>
    %151 = arith.mulf %147, %111 : vector<2x64xf32>
    %152 = arith.mulf %146, %150 : vector<2x64xf32>
    %153 = arith.addf %151, %152 : vector<2x64xf32>
    %154 = math.tanh %153 : vector<2x64xf32>
    %155 = arith.mulf %148, %154 : vector<2x64xf32>
    %c0_45 = arith.constant 0 : index
    %c0_46 = arith.constant 0 : index
    %156 = vector.load %arg4[%c0_45, %c0_46] : memref<64x256xf32, #tpu.memory_space<vmem>>, vector<64x256xf32>
    %cst_47 = arith.constant dense<0.000000e+00> : vector<2x256xf32>
    %157 = tpu.matmul %155, %156, %cst_47 {dimension_numbers = #tpu.dot_dimension_numbers<[1], [0], [0], [1], [0, 0, 1, 1], [], []>} : vector<2x64xf32>, vector<64x256xf32>, vector<2x256xf32> -> vector<2x256xf32>
    %c0_48 = arith.constant 0 : index
    %c0_49 = arith.constant 0 : index
    %158 = vector.load %arg5[%c0_48, %c0_49] : memref<64x256xf32, #tpu.memory_space<vmem>>, vector<64x256xf32>
    %cst_50 = arith.constant dense<0.000000e+00> : vector<2x256xf32>
    %159 = tpu.matmul %135, %158, %cst_50 {dimension_numbers = #tpu.dot_dimension_numbers<[1], [0], [0], [1], [0, 0, 1, 1], [], []>} : vector<2x64xf32>, vector<64x256xf32>, vector<2x256xf32> -> vector<2x256xf32>
    %160 = arith.addf %157, %159 : vector<2x256xf32>
    %161 = arith.addf %160, %8 : vector<2x256xf32>
    %162 = vector.extract_strided_slice %161 {offsets = [0, 0], sizes = [2, 192], strides = [1, 1]} : vector<2x256xf32> to vector<2x192xf32>
    %163 = arith.negf %162 : vector<2x192xf32>
    %164 = math.exp %163 : vector<2x192xf32>
    %cst_51 = arith.constant 1.000000e+00 : f32
    %165 = vector.broadcast %cst_51 : f32 to vector<2x192xf32>
    %166 = arith.addf %165, %164 : vector<2x192xf32>
    %167 = arith.divf %165, %166 : vector<2x192xf32>
    %168 = vector.extract_strided_slice %167 {offsets = [0, 0], sizes = [2, 64], strides = [1, 1]} : vector<2x192xf32> to vector<2x64xf32>
    %169 = vector.extract_strided_slice %167 {offsets = [0, 64], sizes = [2, 64], strides = [1, 1]} : vector<2x192xf32> to vector<2x64xf32>
    %170 = vector.extract_strided_slice %167 {offsets = [0, 128], sizes = [2, 64], strides = [1, 1]} : vector<2x192xf32> to vector<2x64xf32>
    %171 = vector.extract_strided_slice %161 {offsets = [0, 192], sizes = [2, 64], strides = [1, 1]} : vector<2x256xf32> to vector<2x64xf32>
    %172 = math.tanh %171 : vector<2x64xf32>
    %173 = arith.mulf %169, %133 : vector<2x64xf32>
    %174 = arith.mulf %168, %172 : vector<2x64xf32>
    %175 = arith.addf %173, %174 : vector<2x64xf32>
    %176 = math.tanh %175 : vector<2x64xf32>
    %177 = arith.mulf %170, %176 : vector<2x64xf32>
    %c0_52 = arith.constant 0 : index
    %c0_53 = arith.constant 0 : index
    %178 = vector.load %arg2[%c0_52, %c0_53] : memref<64x256xf32, #tpu.memory_space<vmem>>, vector<64x256xf32>
    %cst_54 = arith.constant dense<0.000000e+00> : vector<2x256xf32>
    %179 = tpu.matmul %155, %178, %cst_54 {dimension_numbers = #tpu.dot_dimension_numbers<[1], [0], [0], [1], [0, 0, 1, 1], [], []>} : vector<2x64xf32>, vector<64x256xf32>, vector<2x256xf32> -> vector<2x256xf32>
    %180 = vector.extract_strided_slice %5 {offsets = [8, 0], sizes = [2, 256], strides = [1, 1]} : vector<16x256xf32> to vector<2x256xf32>
    %181 = arith.addf %179, %180 : vector<2x256xf32>
    %182 = vector.extract_strided_slice %181 {offsets = [0, 0], sizes = [2, 192], strides = [1, 1]} : vector<2x256xf32> to vector<2x192xf32>
    %183 = arith.negf %182 : vector<2x192xf32>
    %184 = math.exp %183 : vector<2x192xf32>
    %cst_55 = arith.constant 1.000000e+00 : f32
    %185 = vector.broadcast %cst_55 : f32 to vector<2x192xf32>
    %186 = arith.addf %185, %184 : vector<2x192xf32>
    %187 = arith.divf %185, %186 : vector<2x192xf32>
    %188 = vector.extract_strided_slice %187 {offsets = [0, 0], sizes = [2, 64], strides = [1, 1]} : vector<2x192xf32> to vector<2x64xf32>
    %189 = vector.extract_strided_slice %187 {offsets = [0, 64], sizes = [2, 64], strides = [1, 1]} : vector<2x192xf32> to vector<2x64xf32>
    %190 = vector.extract_strided_slice %187 {offsets = [0, 128], sizes = [2, 64], strides = [1, 1]} : vector<2x192xf32> to vector<2x64xf32>
    %191 = vector.extract_strided_slice %181 {offsets = [0, 192], sizes = [2, 64], strides = [1, 1]} : vector<2x256xf32> to vector<2x64xf32>
    %192 = math.tanh %191 : vector<2x64xf32>
    %193 = arith.mulf %189, %153 : vector<2x64xf32>
    %194 = arith.mulf %188, %192 : vector<2x64xf32>
    %195 = arith.addf %193, %194 : vector<2x64xf32>
    %196 = math.tanh %195 : vector<2x64xf32>
    %197 = arith.mulf %190, %196 : vector<2x64xf32>
    %c0_56 = arith.constant 0 : index
    %c0_57 = arith.constant 0 : index
    %198 = vector.load %arg4[%c0_56, %c0_57] : memref<64x256xf32, #tpu.memory_space<vmem>>, vector<64x256xf32>
    %cst_58 = arith.constant dense<0.000000e+00> : vector<2x256xf32>
    %199 = tpu.matmul %197, %198, %cst_58 {dimension_numbers = #tpu.dot_dimension_numbers<[1], [0], [0], [1], [0, 0, 1, 1], [], []>} : vector<2x64xf32>, vector<64x256xf32>, vector<2x256xf32> -> vector<2x256xf32>
    %c0_59 = arith.constant 0 : index
    %c0_60 = arith.constant 0 : index
    %200 = vector.load %arg5[%c0_59, %c0_60] : memref<64x256xf32, #tpu.memory_space<vmem>>, vector<64x256xf32>
    %cst_61 = arith.constant dense<0.000000e+00> : vector<2x256xf32>
    %201 = tpu.matmul %177, %200, %cst_61 {dimension_numbers = #tpu.dot_dimension_numbers<[1], [0], [0], [1], [0, 0, 1, 1], [], []>} : vector<2x64xf32>, vector<64x256xf32>, vector<2x256xf32> -> vector<2x256xf32>
    %202 = arith.addf %199, %201 : vector<2x256xf32>
    %203 = arith.addf %202, %8 : vector<2x256xf32>
    %204 = vector.extract_strided_slice %203 {offsets = [0, 0], sizes = [2, 192], strides = [1, 1]} : vector<2x256xf32> to vector<2x192xf32>
    %205 = arith.negf %204 : vector<2x192xf32>
    %206 = math.exp %205 : vector<2x192xf32>
    %cst_62 = arith.constant 1.000000e+00 : f32
    %207 = vector.broadcast %cst_62 : f32 to vector<2x192xf32>
    %208 = arith.addf %207, %206 : vector<2x192xf32>
    %209 = arith.divf %207, %208 : vector<2x192xf32>
    %210 = vector.extract_strided_slice %209 {offsets = [0, 0], sizes = [2, 64], strides = [1, 1]} : vector<2x192xf32> to vector<2x64xf32>
    %211 = vector.extract_strided_slice %209 {offsets = [0, 64], sizes = [2, 64], strides = [1, 1]} : vector<2x192xf32> to vector<2x64xf32>
    %212 = vector.extract_strided_slice %209 {offsets = [0, 128], sizes = [2, 64], strides = [1, 1]} : vector<2x192xf32> to vector<2x64xf32>
    %213 = vector.extract_strided_slice %203 {offsets = [0, 192], sizes = [2, 64], strides = [1, 1]} : vector<2x256xf32> to vector<2x64xf32>
    %214 = math.tanh %213 : vector<2x64xf32>
    %215 = arith.mulf %211, %175 : vector<2x64xf32>
    %216 = arith.mulf %210, %214 : vector<2x64xf32>
    %217 = arith.addf %215, %216 : vector<2x64xf32>
    %218 = math.tanh %217 : vector<2x64xf32>
    %219 = arith.mulf %212, %218 : vector<2x64xf32>
    %c0_63 = arith.constant 0 : index
    %c0_64 = arith.constant 0 : index
    %220 = vector.load %arg2[%c0_63, %c0_64] : memref<64x256xf32, #tpu.memory_space<vmem>>, vector<64x256xf32>
    %cst_65 = arith.constant dense<0.000000e+00> : vector<2x256xf32>
    %221 = tpu.matmul %197, %220, %cst_65 {dimension_numbers = #tpu.dot_dimension_numbers<[1], [0], [0], [1], [0, 0, 1, 1], [], []>} : vector<2x64xf32>, vector<64x256xf32>, vector<2x256xf32> -> vector<2x256xf32>
    %222 = vector.extract_strided_slice %5 {offsets = [10, 0], sizes = [2, 256], strides = [1, 1]} : vector<16x256xf32> to vector<2x256xf32>
    %223 = arith.addf %221, %222 : vector<2x256xf32>
    %224 = vector.extract_strided_slice %223 {offsets = [0, 0], sizes = [2, 192], strides = [1, 1]} : vector<2x256xf32> to vector<2x192xf32>
    %225 = arith.negf %224 : vector<2x192xf32>
    %226 = math.exp %225 : vector<2x192xf32>
    %cst_66 = arith.constant 1.000000e+00 : f32
    %227 = vector.broadcast %cst_66 : f32 to vector<2x192xf32>
    %228 = arith.addf %227, %226 : vector<2x192xf32>
    %229 = arith.divf %227, %228 : vector<2x192xf32>
    %230 = vector.extract_strided_slice %229 {offsets = [0, 0], sizes = [2, 64], strides = [1, 1]} : vector<2x192xf32> to vector<2x64xf32>
    %231 = vector.extract_strided_slice %229 {offsets = [0, 64], sizes = [2, 64], strides = [1, 1]} : vector<2x192xf32> to vector<2x64xf32>
    %232 = vector.extract_strided_slice %229 {offsets = [0, 128], sizes = [2, 64], strides = [1, 1]} : vector<2x192xf32> to vector<2x64xf32>
    %233 = vector.extract_strided_slice %223 {offsets = [0, 192], sizes = [2, 64], strides = [1, 1]} : vector<2x256xf32> to vector<2x64xf32>
    %234 = math.tanh %233 : vector<2x64xf32>
    %235 = arith.mulf %231, %195 : vector<2x64xf32>
    %236 = arith.mulf %230, %234 : vector<2x64xf32>
    %237 = arith.addf %235, %236 : vector<2x64xf32>
    %238 = math.tanh %237 : vector<2x64xf32>
    %239 = arith.mulf %232, %238 : vector<2x64xf32>
    %c0_67 = arith.constant 0 : index
    %c0_68 = arith.constant 0 : index
    %240 = vector.load %arg4[%c0_67, %c0_68] : memref<64x256xf32, #tpu.memory_space<vmem>>, vector<64x256xf32>
    %cst_69 = arith.constant dense<0.000000e+00> : vector<2x256xf32>
    %241 = tpu.matmul %239, %240, %cst_69 {dimension_numbers = #tpu.dot_dimension_numbers<[1], [0], [0], [1], [0, 0, 1, 1], [], []>} : vector<2x64xf32>, vector<64x256xf32>, vector<2x256xf32> -> vector<2x256xf32>
    %c0_70 = arith.constant 0 : index
    %c0_71 = arith.constant 0 : index
    %242 = vector.load %arg5[%c0_70, %c0_71] : memref<64x256xf32, #tpu.memory_space<vmem>>, vector<64x256xf32>
    %cst_72 = arith.constant dense<0.000000e+00> : vector<2x256xf32>
    %243 = tpu.matmul %219, %242, %cst_72 {dimension_numbers = #tpu.dot_dimension_numbers<[1], [0], [0], [1], [0, 0, 1, 1], [], []>} : vector<2x64xf32>, vector<64x256xf32>, vector<2x256xf32> -> vector<2x256xf32>
    %244 = arith.addf %241, %243 : vector<2x256xf32>
    %245 = arith.addf %244, %8 : vector<2x256xf32>
    %246 = vector.extract_strided_slice %245 {offsets = [0, 0], sizes = [2, 192], strides = [1, 1]} : vector<2x256xf32> to vector<2x192xf32>
    %247 = arith.negf %246 : vector<2x192xf32>
    %248 = math.exp %247 : vector<2x192xf32>
    %cst_73 = arith.constant 1.000000e+00 : f32
    %249 = vector.broadcast %cst_73 : f32 to vector<2x192xf32>
    %250 = arith.addf %249, %248 : vector<2x192xf32>
    %251 = arith.divf %249, %250 : vector<2x192xf32>
    %252 = vector.extract_strided_slice %251 {offsets = [0, 0], sizes = [2, 64], strides = [1, 1]} : vector<2x192xf32> to vector<2x64xf32>
    %253 = vector.extract_strided_slice %251 {offsets = [0, 64], sizes = [2, 64], strides = [1, 1]} : vector<2x192xf32> to vector<2x64xf32>
    %254 = vector.extract_strided_slice %251 {offsets = [0, 128], sizes = [2, 64], strides = [1, 1]} : vector<2x192xf32> to vector<2x64xf32>
    %255 = vector.extract_strided_slice %245 {offsets = [0, 192], sizes = [2, 64], strides = [1, 1]} : vector<2x256xf32> to vector<2x64xf32>
    %256 = math.tanh %255 : vector<2x64xf32>
    %257 = arith.mulf %253, %217 : vector<2x64xf32>
    %258 = arith.mulf %252, %256 : vector<2x64xf32>
    %259 = arith.addf %257, %258 : vector<2x64xf32>
    %260 = math.tanh %259 : vector<2x64xf32>
    %261 = arith.mulf %254, %260 : vector<2x64xf32>
    %c0_74 = arith.constant 0 : index
    %c0_75 = arith.constant 0 : index
    %262 = vector.load %arg2[%c0_74, %c0_75] : memref<64x256xf32, #tpu.memory_space<vmem>>, vector<64x256xf32>
    %cst_76 = arith.constant dense<0.000000e+00> : vector<2x256xf32>
    %263 = tpu.matmul %239, %262, %cst_76 {dimension_numbers = #tpu.dot_dimension_numbers<[1], [0], [0], [1], [0, 0, 1, 1], [], []>} : vector<2x64xf32>, vector<64x256xf32>, vector<2x256xf32> -> vector<2x256xf32>
    %264 = vector.extract_strided_slice %5 {offsets = [12, 0], sizes = [2, 256], strides = [1, 1]} : vector<16x256xf32> to vector<2x256xf32>
    %265 = arith.addf %263, %264 : vector<2x256xf32>
    %266 = vector.extract_strided_slice %265 {offsets = [0, 0], sizes = [2, 192], strides = [1, 1]} : vector<2x256xf32> to vector<2x192xf32>
    %267 = arith.negf %266 : vector<2x192xf32>
    %268 = math.exp %267 : vector<2x192xf32>
    %cst_77 = arith.constant 1.000000e+00 : f32
    %269 = vector.broadcast %cst_77 : f32 to vector<2x192xf32>
    %270 = arith.addf %269, %268 : vector<2x192xf32>
    %271 = arith.divf %269, %270 : vector<2x192xf32>
    %272 = vector.extract_strided_slice %271 {offsets = [0, 0], sizes = [2, 64], strides = [1, 1]} : vector<2x192xf32> to vector<2x64xf32>
    %273 = vector.extract_strided_slice %271 {offsets = [0, 64], sizes = [2, 64], strides = [1, 1]} : vector<2x192xf32> to vector<2x64xf32>
    %274 = vector.extract_strided_slice %271 {offsets = [0, 128], sizes = [2, 64], strides = [1, 1]} : vector<2x192xf32> to vector<2x64xf32>
    %275 = vector.extract_strided_slice %265 {offsets = [0, 192], sizes = [2, 64], strides = [1, 1]} : vector<2x256xf32> to vector<2x64xf32>
    %276 = math.tanh %275 : vector<2x64xf32>
    %277 = arith.mulf %273, %237 : vector<2x64xf32>
    %278 = arith.mulf %272, %276 : vector<2x64xf32>
    %279 = arith.addf %277, %278 : vector<2x64xf32>
    %280 = math.tanh %279 : vector<2x64xf32>
    %281 = arith.mulf %274, %280 : vector<2x64xf32>
    %c0_78 = arith.constant 0 : index
    %c0_79 = arith.constant 0 : index
    %282 = vector.load %arg4[%c0_78, %c0_79] : memref<64x256xf32, #tpu.memory_space<vmem>>, vector<64x256xf32>
    %cst_80 = arith.constant dense<0.000000e+00> : vector<2x256xf32>
    %283 = tpu.matmul %281, %282, %cst_80 {dimension_numbers = #tpu.dot_dimension_numbers<[1], [0], [0], [1], [0, 0, 1, 1], [], []>} : vector<2x64xf32>, vector<64x256xf32>, vector<2x256xf32> -> vector<2x256xf32>
    %c0_81 = arith.constant 0 : index
    %c0_82 = arith.constant 0 : index
    %284 = vector.load %arg5[%c0_81, %c0_82] : memref<64x256xf32, #tpu.memory_space<vmem>>, vector<64x256xf32>
    %cst_83 = arith.constant dense<0.000000e+00> : vector<2x256xf32>
    %285 = tpu.matmul %261, %284, %cst_83 {dimension_numbers = #tpu.dot_dimension_numbers<[1], [0], [0], [1], [0, 0, 1, 1], [], []>} : vector<2x64xf32>, vector<64x256xf32>, vector<2x256xf32> -> vector<2x256xf32>
    %286 = arith.addf %283, %285 : vector<2x256xf32>
    %287 = arith.addf %286, %8 : vector<2x256xf32>
    %288 = vector.extract_strided_slice %287 {offsets = [0, 0], sizes = [2, 192], strides = [1, 1]} : vector<2x256xf32> to vector<2x192xf32>
    %289 = arith.negf %288 : vector<2x192xf32>
    %290 = math.exp %289 : vector<2x192xf32>
    %cst_84 = arith.constant 1.000000e+00 : f32
    %291 = vector.broadcast %cst_84 : f32 to vector<2x192xf32>
    %292 = arith.addf %291, %290 : vector<2x192xf32>
    %293 = arith.divf %291, %292 : vector<2x192xf32>
    %294 = vector.extract_strided_slice %293 {offsets = [0, 0], sizes = [2, 64], strides = [1, 1]} : vector<2x192xf32> to vector<2x64xf32>
    %295 = vector.extract_strided_slice %293 {offsets = [0, 64], sizes = [2, 64], strides = [1, 1]} : vector<2x192xf32> to vector<2x64xf32>
    %296 = vector.extract_strided_slice %293 {offsets = [0, 128], sizes = [2, 64], strides = [1, 1]} : vector<2x192xf32> to vector<2x64xf32>
    %297 = vector.extract_strided_slice %287 {offsets = [0, 192], sizes = [2, 64], strides = [1, 1]} : vector<2x256xf32> to vector<2x64xf32>
    %298 = math.tanh %297 : vector<2x64xf32>
    %299 = arith.mulf %295, %259 : vector<2x64xf32>
    %300 = arith.mulf %294, %298 : vector<2x64xf32>
    %301 = arith.addf %299, %300 : vector<2x64xf32>
    %302 = math.tanh %301 : vector<2x64xf32>
    %303 = arith.mulf %296, %302 : vector<2x64xf32>
    %c0_85 = arith.constant 0 : index
    %c0_86 = arith.constant 0 : index
    %304 = vector.load %arg2[%c0_85, %c0_86] : memref<64x256xf32, #tpu.memory_space<vmem>>, vector<64x256xf32>
    %cst_87 = arith.constant dense<0.000000e+00> : vector<2x256xf32>
    %305 = tpu.matmul %281, %304, %cst_87 {dimension_numbers = #tpu.dot_dimension_numbers<[1], [0], [0], [1], [0, 0, 1, 1], [], []>} : vector<2x64xf32>, vector<64x256xf32>, vector<2x256xf32> -> vector<2x256xf32>
    %306 = vector.extract_strided_slice %5 {offsets = [14, 0], sizes = [2, 256], strides = [1, 1]} : vector<16x256xf32> to vector<2x256xf32>
    %307 = arith.addf %305, %306 : vector<2x256xf32>
    %308 = vector.extract_strided_slice %307 {offsets = [0, 0], sizes = [2, 192], strides = [1, 1]} : vector<2x256xf32> to vector<2x192xf32>
    %309 = arith.negf %308 : vector<2x192xf32>
    %310 = math.exp %309 : vector<2x192xf32>
    %cst_88 = arith.constant 1.000000e+00 : f32
    %311 = vector.broadcast %cst_88 : f32 to vector<2x192xf32>
    %312 = arith.addf %311, %310 : vector<2x192xf32>
    %313 = arith.divf %311, %312 : vector<2x192xf32>
    %314 = vector.extract_strided_slice %313 {offsets = [0, 0], sizes = [2, 64], strides = [1, 1]} : vector<2x192xf32> to vector<2x64xf32>
    %315 = vector.extract_strided_slice %313 {offsets = [0, 64], sizes = [2, 64], strides = [1, 1]} : vector<2x192xf32> to vector<2x64xf32>
    %316 = vector.extract_strided_slice %313 {offsets = [0, 128], sizes = [2, 64], strides = [1, 1]} : vector<2x192xf32> to vector<2x64xf32>
    %317 = vector.extract_strided_slice %307 {offsets = [0, 192], sizes = [2, 64], strides = [1, 1]} : vector<2x256xf32> to vector<2x64xf32>
    %318 = math.tanh %317 : vector<2x64xf32>
    %319 = arith.mulf %315, %279 : vector<2x64xf32>
    %320 = arith.mulf %314, %318 : vector<2x64xf32>
    %321 = arith.addf %319, %320 : vector<2x64xf32>
    %322 = math.tanh %321 : vector<2x64xf32>
    %323 = arith.mulf %316, %322 : vector<2x64xf32>
    %c0_89 = arith.constant 0 : index
    %c0_90 = arith.constant 0 : index
    %324 = vector.load %arg4[%c0_89, %c0_90] : memref<64x256xf32, #tpu.memory_space<vmem>>, vector<64x256xf32>
    %cst_91 = arith.constant dense<0.000000e+00> : vector<2x256xf32>
    %325 = tpu.matmul %323, %324, %cst_91 {dimension_numbers = #tpu.dot_dimension_numbers<[1], [0], [0], [1], [0, 0, 1, 1], [], []>} : vector<2x64xf32>, vector<64x256xf32>, vector<2x256xf32> -> vector<2x256xf32>
    %c0_92 = arith.constant 0 : index
    %c0_93 = arith.constant 0 : index
    %326 = vector.load %arg5[%c0_92, %c0_93] : memref<64x256xf32, #tpu.memory_space<vmem>>, vector<64x256xf32>
    %cst_94 = arith.constant dense<0.000000e+00> : vector<2x256xf32>
    %327 = tpu.matmul %303, %326, %cst_94 {dimension_numbers = #tpu.dot_dimension_numbers<[1], [0], [0], [1], [0, 0, 1, 1], [], []>} : vector<2x64xf32>, vector<64x256xf32>, vector<2x256xf32> -> vector<2x256xf32>
    %328 = arith.addf %325, %327 : vector<2x256xf32>
    %329 = arith.addf %328, %8 : vector<2x256xf32>
    %330 = vector.extract_strided_slice %329 {offsets = [0, 0], sizes = [2, 192], strides = [1, 1]} : vector<2x256xf32> to vector<2x192xf32>
    %331 = arith.negf %330 : vector<2x192xf32>
    %332 = math.exp %331 : vector<2x192xf32>
    %cst_95 = arith.constant 1.000000e+00 : f32
    %333 = vector.broadcast %cst_95 : f32 to vector<2x192xf32>
    %334 = arith.addf %333, %332 : vector<2x192xf32>
    %335 = arith.divf %333, %334 : vector<2x192xf32>
    %336 = vector.extract_strided_slice %335 {offsets = [0, 0], sizes = [2, 64], strides = [1, 1]} : vector<2x192xf32> to vector<2x64xf32>
    %337 = vector.extract_strided_slice %335 {offsets = [0, 64], sizes = [2, 64], strides = [1, 1]} : vector<2x192xf32> to vector<2x64xf32>
    %338 = vector.extract_strided_slice %335 {offsets = [0, 128], sizes = [2, 64], strides = [1, 1]} : vector<2x192xf32> to vector<2x64xf32>
    %339 = vector.extract_strided_slice %329 {offsets = [0, 192], sizes = [2, 64], strides = [1, 1]} : vector<2x256xf32> to vector<2x64xf32>
    %340 = math.tanh %339 : vector<2x64xf32>
    %341 = arith.mulf %337, %301 : vector<2x64xf32>
    %342 = arith.mulf %336, %340 : vector<2x64xf32>
    %343 = arith.addf %341, %342 : vector<2x64xf32>
    %344 = math.tanh %343 : vector<2x64xf32>
    %345 = arith.mulf %338, %344 : vector<2x64xf32>
    %c0_96 = arith.constant 0 : index
    %c0_97 = arith.constant 0 : index
    %346 = vector.load %arg7[%c0_96, %c0_97] : memref<64x14xf32, #tpu.memory_space<vmem>>, vector<64x14xf32>
    %cst_98 = arith.constant dense<0.000000e+00> : vector<2x14xf32>
    %347 = tpu.matmul %345, %346, %cst_98 {dimension_numbers = #tpu.dot_dimension_numbers<[1], [0], [0], [1], [0, 0, 1, 1], [], []>} : vector<2x64xf32>, vector<64x14xf32>, vector<2x14xf32> -> vector<2x14xf32>
    %c0_99 = arith.constant 0 : index
    %c0_100 = arith.constant 0 : index
    %348 = vector.load %arg8[%c0_99, %c0_100] : memref<1x14xf32, #tpu.memory_space<vmem>>, vector<1x14xf32>
    %349 = vector.broadcast %348 : vector<1x14xf32> to vector<2x14xf32>
    %350 = arith.addf %347, %349 : vector<2x14xf32>
    %c0_101 = arith.constant 0 : index
    %c0_102 = arith.constant 0 : index
    %351 = vector.load %arg9[%c0_101, %c0_102] : memref<2x14xf32, #tpu.memory_space<vmem>>, vector<2x14xf32>
    tpu.vector_store %arg9[%c0_101, %c0_102], %350 {strides = array<i32>} : memref<2x14xf32, #tpu.memory_space<vmem>>, vector<2x14xf32>,
    return
  }
}

</mosaic_0001>

<llo_original>
// kernel: multi_output_lstm.1
$region0: #{multi_output_lstm.1}
  #allocation0 [shape = 'u32[]', space=smem, size = 0x4, offset = 0x4, fixed_abs, tag = 'smem constant byte address 0x4 - core index']
  #allocation1 [shape = 'u32[72,128]{1,0:T(1,128)}', space=vmem, size = 0x9000, scoped, tag = 'internal scratch']
  %s0 = inlined_call_operand.vmem [shape: f32[16,64], index: 0, kind: input, shape index: {}]
  %s1 = inlined_call_operand.hbm [shape: f32[64,256], index: 1, kind: input, shape index: {}]
  %s2 = inlined_call_operand.hbm [shape: f32[64,256], index: 2, kind: input, shape index: {}]
  %s3 = inlined_call_operand.vmem [shape: f32[1,256], index: 3, kind: input, shape index: {}]
  %s4 = inlined_call_operand.hbm [shape: f32[64,256], index: 4, kind: input, shape index: {}]
  %s5 = inlined_call_operand.hbm [shape: f32[64,256], index: 5, kind: input, shape index: {}]
  %s6 = inlined_call_operand.vmem [shape: f32[1,256], index: 6, kind: input, shape index: {}]
  %s7 = inlined_call_operand.vmem [shape: f32[64,14], index: 7, kind: input, shape index: {}]
  %s8 = inlined_call_operand.vmem [shape: f32[1,14], index: 8, kind: input, shape index: {}]
  %s9 = inlined_call_operand.hbm [shape: f32[2,14], index: 9, kind: output, shape index: {}]
  %s10 = sld [smem:[#allocation0]]
  $region62: #{multi_output_lstm.1} parent=0
    _
  %s12 = ssub.s32 1, %s10
  %s13 = scalar_select 0, %s12, %s10
  $region1: #{multi_output_lstm.1} parent=0
    #allocation2 [shape = 'u8[65536]{0}', space=vmem, size = 0x10000, scoped, tag = 'input window, operand 1, single buffered']
    #allocation3 [shape = 's32[1]{0}', space=sflag, size = 0x4, scoped, tag = 'scoped memory for multi_output_lstm.1']
    #allocation4 [shape = 's32[1]{0}', space=sflag, size = 0x4, scoped, tag = 'scoped memory for multi_output_lstm.1']
    #allocation5 [shape = 'u8[65536]{0}', space=vmem, size = 0x10000, scoped, tag = 'input window, operand 2, single buffered']
    #allocation6 [shape = 's32[1]{0}', space=sflag, size = 0x4, scoped, tag = 'scoped memory for multi_output_lstm.1']
    #allocation7 [shape = 'u8[65536]{0}', space=vmem, size = 0x10000, scoped, tag = 'input window, operand 4, single buffered']
    #allocation8 [shape = 'u8[65536]{0}', space=vmem, size = 0x10000, scoped, tag = 'input window, operand 5, single buffered']
    #allocation9 [shape = 's32[1]{0}', space=sflag, size = 0x4, scoped, tag = 'scoped memory for multi_output_lstm.1']
    #allocation10 [shape = 'u8[1024]{0}', space=vmem, size = 0x400, scoped, tag = 'output window, operand 0, single buffered']
    %14 = vsyncpa [#allocation3], 0
    %15 = vsyncpa [#allocation6], 0
    %16 = vsyncpa [#allocation9], 0
    %17 = vsyncpa [#allocation4], 0
    // Predicated region
    $region2: #{multi_output_lstm.1} parent=1 // pred_check
      _
    $region3: #{multi_output_lstm.1} parent=1 // pred_check_branch
      %19 = sbr.rel (0) target = $region5
    $region4: #{multi_output_lstm.1} parent=1 // pred_region
      _
    $region5: #{multi_output_lstm.1} parent=1 // pred_fallthru
      _
    // Predicated region
    $region6: #{multi_output_lstm.1} parent=1 // pred_check
      _
    $region7: #{multi_output_lstm.1} parent=1 // pred_check_branch
      %21 = sbr.rel (0) target = $region9
    $region8: #{multi_output_lstm.1} parent=1 // pred_region
      %23 = vsyncadd [#allocation3], 0
      %s24 = sshll.u32 %s1, 4
      %s25 = int_to_ptr.hbm [resolvable:$true] %s24
      %s26 = sshll.u32 [#allocation2], 4
      %s27 = int_to_ptr.vmem [resolvable:$true] %s26
      %32 = dma.hbm_to_vmem [thread:$0]  %s25, 2048, %s27, [#allocation3], 256, 256, 16
    $region9: #{multi_output_lstm.1} parent=1 // pred_fallthru
      _
    // Predicated region
    $region10: #{multi_output_lstm.1} parent=1 // pred_check
      _
    $region11: #{multi_output_lstm.1} parent=1 // pred_check_branch
      %34 = sbr.rel (0) target = $region13
    $region12: #{multi_output_lstm.1} parent=1 // pred_region
      %36 = vsyncadd [#allocation6], 0
      %s37 = sshll.u32 %s2, 4
      %s38 = int_to_ptr.hbm [resolvable:$true] %s37
      %s39 = sshll.u32 [#allocation5], 4
      %s40 = int_to_ptr.vmem [resolvable:$true] %s39
      %45 = dma.hbm_to_vmem [thread:$0]  %s38, 2048, %s40, [#allocation6], 256, 256, 16
    $region13: #{multi_output_lstm.1} parent=1 // pred_fallthru
      _
    // Predicated region
    $region14: #{multi_output_lstm.1} parent=1 // pred_check
      _
    $region15: #{multi_output_lstm.1} parent=1 // pred_check_branch
      %47 = sbr.rel (0) target = $region17
    $region16: #{multi_output_lstm.1} parent=1 // pred_region
      _
    $region17: #{multi_output_lstm.1} parent=1 // pred_fallthru
      _
    // Predicated region
    $region18: #{multi_output_lstm.1} parent=1 // pred_check
      _
    $region19: #{multi_output_lstm.1} parent=1 // pred_check_branch
      %49 = sbr.rel (0) target = $region21
    $region20: #{multi_output_lstm.1} parent=1 // pred_region
      %51 = vsyncadd [#allocation6], 0
      %s52 = sshll.u32 %s4, 4
      %s53 = int_to_ptr.hbm [resolvable:$true] %s52
      %s54 = sshll.u32 [#allocation7], 4
      %s55 = int_to_ptr.vmem [resolvable:$true] %s54
      %60 = dma.hbm_to_vmem [thread:$0]  %s53, 2048, %s55, [#allocation6], 256, 256, 16
    $region21: #{multi_output_lstm.1} parent=1 // pred_fallthru
      _
    // Predicated region
    $region22: #{multi_output_lstm.1} parent=1 // pred_check
      _
    $region23: #{multi_output_lstm.1} parent=1 // pred_check_branch
      %62 = sbr.rel (0) target = $region25
    $region24: #{multi_output_lstm.1} parent=1 // pred_region
      %64 = vsyncadd [#allocation9], 0
      %s65 = sshll.u32 %s5, 4
      %s66 = int_to_ptr.hbm [resolvable:$true] %s65
      %s67 = sshll.u32 [#allocation8], 4
      %s68 = int_to_ptr.vmem [resolvable:$true] %s67
      %73 = dma.hbm_to_vmem [thread:$0]  %s66, 2048, %s68, [#allocation9], 256, 256, 16
    $region25: #{multi_output_lstm.1} parent=1 // pred_fallthru
      _
    // Predicated region
    $region26: #{multi_output_lstm.1} parent=1 // pred_check
      _
    $region27: #{multi_output_lstm.1} parent=1 // pred_check_branch
      %75 = sbr.rel (0) target = $region29
    $region28: #{multi_output_lstm.1} parent=1 // pred_region
      _
    $region29: #{multi_output_lstm.1} parent=1 // pred_fallthru
      _
    // Predicated region
    $region30: #{multi_output_lstm.1} parent=1 // pred_check
      _
    $region31: #{multi_output_lstm.1} parent=1 // pred_check_branch
      %77 = sbr.rel (0) target = $region33
    $region32: #{multi_output_lstm.1} parent=1 // pred_region
      _
    $region33: #{multi_output_lstm.1} parent=1 // pred_fallthru
      _
    // Predicated region
    $region34: #{multi_output_lstm.1} parent=1 // pred_check
      _
    $region35: #{multi_output_lstm.1} parent=1 // pred_check_branch
      %79 = sbr.rel (0) target = $region37
    $region36: #{multi_output_lstm.1} parent=1 // pred_region
      _
    $region37: #{multi_output_lstm.1} parent=1 // pred_fallthru
      _
    // Predicated region
    $region38: #{multi_output_lstm.1} parent=1 // pred_check
      _
    $region39: #{multi_output_lstm.1} parent=1 // pred_check_branch
      %81 = sbr.rel (0) target = $region41
    $region40: #{multi_output_lstm.1} parent=1 // pred_region
      %83 = dma.done [#allocation3], 2048
    $region41: #{multi_output_lstm.1} parent=1 // pred_fallthru
      _
    // Predicated region
    $region42: #{multi_output_lstm.1} parent=1 // pred_check
      _
    $region43: #{multi_output_lstm.1} parent=1 // pred_check_branch
      %85 = sbr.rel (0) target = $region45
    $region44: #{multi_output_lstm.1} parent=1 // pred_region
      %87 = dma.done [#allocation6], 2048
    $region45: #{multi_output_lstm.1} parent=1 // pred_fallthru
      _
    // Predicated region
    $region46: #{multi_output_lstm.1} parent=1 // pred_check
      _
    $region47: #{multi_output_lstm.1} parent=1 // pred_check_branch
      %89 = sbr.rel (0) target = $region49
    $region48: #{multi_output_lstm.1} parent=1 // pred_region
      %91 = dma.done [#allocation6], 2048
    $region49: #{multi_output_lstm.1} parent=1 // pred_fallthru
      _
    // Predicated region
    $region50: #{multi_output_lstm.1} parent=1 // pred_check
      _
    $region51: #{multi_output_lstm.1} parent=1 // pred_check_branch
      %93 = sbr.rel (0) target = $region53
    $region52: #{multi_output_lstm.1} parent=1 // pred_region
      %95 = dma.done [#allocation9], 2048
    $region53: #{multi_output_lstm.1} parent=1 // pred_fallthru
      _
    %v96 = vld [vmem:[%s0] sm:$0xff]
    %v97 = vld [vmem:[%s0 + $0x8] sm:$0xff]
    %v98 = vld [vmem:[#allocation2] sm:$0xff]
    %v99 = vld [vmem:[#allocation2 + $0x8] sm:$0xff]
    %v100 = vld [vmem:[#allocation2 + $0x10] sm:$0xff]
    %v101 = vld [vmem:[#allocation2 + $0x18] sm:$0xff]
    %v102 = vld [vmem:[#allocation2 + $0x20] sm:$0xff]
    %v103 = vld [vmem:[#allocation2 + $0x28] sm:$0xff]
    %v104 = vld [vmem:[#allocation2 + $0x30] sm:$0xff]
    %v105 = vld [vmem:[#allocation2 + $0x38] sm:$0xff]
    %v106 = vld [vmem:[#allocation2 + $0x40] sm:$0xff]
    %v107 = vld [vmem:[#allocation2 + $0x48] sm:$0xff]
    %v108 = vld [vmem:[#allocation2 + $0x50] sm:$0xff]
    %v109 = vld [vmem:[#allocation2 + $0x58] sm:$0xff]
    %v110 = vld [vmem:[#allocation2 + $0x60] sm:$0xff]
    %v111 = vld [vmem:[#allocation2 + $0x68] sm:$0xff]
    %v112 = vld [vmem:[#allocation2 + $0x70] sm:$0xff]
    %v113 = vld [vmem:[#allocation2 + $0x78] sm:$0xff]
    %v114 = vld [vmem:[%s3] sm:$0x3]
    %v116 = vperm.slane %v114, 0
    %v117 = vperm.slane %v114, 1
    %vm120 = vcmask 523264
    %v122 = vsel %vm120, %v96, 0
    %v125 = vsel %vm120, %v97, 0
    %127 = vmatpush.msra.mxu0 0.0
    %128 = vmatpush.msra.mxu0 0.0
    %129 = vmatpush.msra.mxu0 0.0
    %130 = vmatpush.msra.mxu0 0.0
    %131 = vmatpush.msra.mxu0 0.0
    %132 = vmatpush.msra.mxu0 0.0
    %133 = vmatpush.msra.mxu0 0.0
    %134 = vmatpush.msra.mxu0 0.0
    %135 = vmatpush.msra.mxu0 %v112
    %136 = vmatpush.msra.mxu0 %v110
    %137 = vmatpush.msra.mxu0 %v108
    %138 = vmatpush.msra.mxu0 %v106
    %139 = vmatpush.msra.mxu0 %v104
    %140 = vmatpush.msra.mxu0 %v102
    %141 = vmatpush.msra.mxu0 %v100
    %142 = vmatpush.msra.mxu0 %v98
    %143 = vmatmul.f32.gmra.mxu0 %v122
    %v144 = vpop.f32.mrf.mxu0
    %v145 = vadd.f32 %v116, %v144
    %146 = vmatmul.f32.gmra.mxu0 %v125
    %v147 = vpop.f32.mrf.mxu0
    %v148 = vadd.f32 %v116, %v147
    %149 = vdwg.mxu0
    %150 = vmatpush.msra.mxu0 0.0
    %151 = vmatpush.msra.mxu0 0.0
    %152 = vmatpush.msra.mxu0 0.0
    %153 = vmatpush.msra.mxu0 0.0
    %154 = vmatpush.msra.mxu0 0.0
    %155 = vmatpush.msra.mxu0 0.0
    %156 = vmatpush.msra.mxu0 0.0
    %157 = vmatpush.msra.mxu0 0.0
    %158 = vmatpush.msra.mxu0 %v113
    %159 = vmatpush.msra.mxu0 %v111
    %160 = vmatpush.msra.mxu0 %v109
    %161 = vmatpush.msra.mxu0 %v107
    %162 = vmatpush.msra.mxu0 %v105
    %163 = vmatpush.msra.mxu0 %v103
    %164 = vmatpush.msra.mxu0 %v101
    %165 = vmatpush.msra.mxu0 %v99
    %166 = vmatmul.f32.gmra.mxu0 %v122
    %v167 = vpop.f32.mrf.mxu0
    %v168 = vadd.f32 %v117, %v167
    %169 = vmatmul.f32.gmra.mxu0 %v125
    %v170 = vpop.f32.mrf.mxu0
    %v171 = vadd.f32 %v117, %v170
    %172 = vdwg.mxu0
    %v173 = vld [vmem:[%s6] sm:$0x3]
    %v175 = vperm.slane %v173, 0
    %v176 = vperm.slane %v173, 1
    %v179 = vld [vmem:[#allocation5] sm:$0xff]
    %v180 = vld [vmem:[#allocation5 + $0x8] sm:$0xff]
    %v181 = vld [vmem:[#allocation5 + $0x10] sm:$0xff]
    %v182 = vld [vmem:[#allocation5 + $0x18] sm:$0xff]
    %v183 = vld [vmem:[#allocation5 + $0x20] sm:$0xff]
    %v184 = vld [vmem:[#allocation5 + $0x28] sm:$0xff]
    %v185 = vld [vmem:[#allocation5 + $0x30] sm:$0xff]
    %v186 = vld [vmem:[#allocation5 + $0x38] sm:$0xff]
    %v187 = vld [vmem:[#allocation5 + $0x40] sm:$0xff]
    %v188 = vld [vmem:[#allocation5 + $0x48] sm:$0xff]
    %v189 = vld [vmem:[#allocation5 + $0x50] sm:$0xff]
    %v190 = vld [vmem:[#allocation5 + $0x58] sm:$0xff]
    %v191 = vld [vmem:[#allocation5 + $0x60] sm:$0xff]
    %v192 = vld [vmem:[#allocation5 + $0x68] sm:$0xff]
    %v193 = vld [vmem:[#allocation5 + $0x70] sm:$0xff]
    %v194 = vld [vmem:[#allocation5 + $0x78] sm:$0xff]
    %v196 = vsel %vm120, 0.0, 0
    %198 = vmatpush.msra.mxu0 0.0
    %199 = vmatpush.msra.mxu0 0.0
    %200 = vmatpush.msra.mxu0 0.0
    %201 = vmatpush.msra.mxu0 0.0
    %202 = vmatpush.msra.mxu0 0.0
    %203 = vmatpush.msra.mxu0 0.0
    %204 = vmatpush.msra.mxu0 0.0
    %205 = vmatpush.msra.mxu0 0.0
    %206 = vmatpush.msra.mxu0 %v193
    %207 = vmatpush.msra.mxu0 %v191
    %208 = vmatpush.msra.mxu0 %v189
    %209 = vmatpush.msra.mxu0 %v187
    %210 = vmatpush.msra.mxu0 %v185
    %211 = vmatpush.msra.mxu0 %v183
    %212 = vmatpush.msra.mxu0 %v181
    %213 = vmatpush.msra.mxu0 %v179
    %214 = vmatmul.f32.gmra.mxu0 %v196
    %v215 = vpop.f32.mrf.mxu0
    %v216 = vadd.f32 %v145, %v215
    %217 = vdwg.mxu0
    %218 = vmatpush.msra.mxu0 0.0
    %219 = vmatpush.msra.mxu0 0.0
    %220 = vmatpush.msra.mxu0 0.0
    %221 = vmatpush.msra.mxu0 0.0
    %222 = vmatpush.msra.mxu0 0.0
    %223 = vmatpush.msra.mxu0 0.0
    %224 = vmatpush.msra.mxu0 0.0
    %225 = vmatpush.msra.mxu0 0.0
    %226 = vmatpush.msra.mxu0 %v194
    %227 = vmatpush.msra.mxu0 %v192
    %228 = vmatpush.msra.mxu0 %v190
    %229 = vmatpush.msra.mxu0 %v188
    %230 = vmatpush.msra.mxu0 %v186
    %231 = vmatpush.msra.mxu0 %v184
    %232 = vmatpush.msra.mxu0 %v182
    %233 = vmatpush.msra.mxu0 %v180
    %234 = vmatmul.f32.gmra.mxu0 %v196
    %v235 = vpop.f32.mrf.mxu0
    %v236 = vadd.f32 %v168, %v235
    %237 = vdwg.mxu0
    %v238 = vxor.u32 %v216, 2147483648
    %v239 = vxor.u32 %v236, 2147483648
    %v240 = vmul.f32 %v238, 1.442695
    %v241 = vpow.pop %v240
    %v242 = vmul.f32 %v239, 1.442695
    %v243 = vpow.pop %v242
    %v244 = vadd.f32 %v241, 1.0
    %v245 = vadd.f32 %v243, 1.0
    %v246 = vrcp.pop %v244
    %v247 = vmul.f32 %v244, %v246
    %v248 = vsub.f32 1.0, %v247
    %v249 = vmul.f32 %v246, %v248
    %v250 = vadd.f32 %v246, %v249
    %vm251 = vweird.f32 %v244
    %vm252 = vweird.f32 %v246
    %vm253 = vmor %vm251, %vm252
    %v254 = vsel %vm253, %v246, %v250
    %v255 = vand.u32 2147483647, %v244
    %vm256 = vcmp.eq.f32.partialorder %v255, 8.507059e+37
    %v257 = vand.u32 %v244, 2147483648
    %v258 = vor.u32 1.1754944e-38, %v257
    %v259 = vsel %vm256, %v258, %v254
    %v260 = vmul.f32 1.0, %v259
    %v261 = vrcp.pop %v245
    %v262 = vmul.f32 %v245, %v261
    %v263 = vsub.f32 1.0, %v262
    %v264 = vmul.f32 %v261, %v263
    %v265 = vadd.f32 %v261, %v264
    %vm266 = vweird.f32 %v245
    %vm267 = vweird.f32 %v261
    %vm268 = vmor %vm266, %vm267
    %v269 = vsel %vm268, %v261, %v265
    %v270 = vand.u32 2147483647, %v245
    %vm271 = vcmp.eq.f32.partialorder %v270, 8.507059e+37
    %v272 = vand.u32 %v245, 2147483648
    %v273 = vor.u32 1.1754944e-38, %v272
    %v274 = vsel %vm271, %v273, %v269
    %v275 = vmul.f32 1.0, %v274
    %v276 = vtanh.pop %v236
    %v277 = vmul.f32 %v260, 0.0
    %279 = vrot.lane.b32.xlu0 %v276, 64
    %v280 = vpop.permute.xlu0 %279
    %v282 = vmul.f32 %v260, %v280
    %284 = vrot.lane.b32.xlu0 %v282, 64
    %v285 = vpop.permute.xlu0 %284
    %v287 = vadd.f32 %v277, %v285
    %v288 = vtanh.pop %v287
    %290 = vrot.lane.b32.xlu0 %v288, 64
    %v291 = vpop.permute.xlu0 %290
    %v293 = vmul.f32 %v275, %v291
    %v294 = vld [vmem:[#allocation7] sm:$0xff]
    %v295 = vld [vmem:[#allocation7 + $0x8] sm:$0xff]
    %v296 = vld [vmem:[#allocation7 + $0x10] sm:$0xff]
    %v297 = vld [vmem:[#allocation7 + $0x18] sm:$0xff]
    %v298 = vld [vmem:[#allocation7 + $0x20] sm:$0xff]
    %v299 = vld [vmem:[#allocation7 + $0x28] sm:$0xff]
    %v300 = vld [vmem:[#allocation7 + $0x30] sm:$0xff]
    %v301 = vld [vmem:[#allocation7 + $0x38] sm:$0xff]
    %v302 = vld [vmem:[#allocation7 + $0x40] sm:$0xff]
    %v303 = vld [vmem:[#allocation7 + $0x48] sm:$0xff]
    %v304 = vld [vmem:[#allocation7 + $0x50] sm:$0xff]
    %v305 = vld [vmem:[#allocation7 + $0x58] sm:$0xff]
    %v306 = vld [vmem:[#allocation7 + $0x60] sm:$0xff]
    %v307 = vld [vmem:[#allocation7 + $0x68] sm:$0xff]
    %v308 = vld [vmem:[#allocation7 + $0x70] sm:$0xff]
    %v309 = vld [vmem:[#allocation7 + $0x78] sm:$0xff]
    %v310 = vld [vmem:[#allocation8] sm:$0xff]
    %v311 = vld [vmem:[#allocation8 + $0x8] sm:$0xff]
    %v312 = vld [vmem:[#allocation8 + $0x10] sm:$0xff]
    %v313 = vld [vmem:[#allocation8 + $0x18] sm:$0xff]
    %v314 = vld [vmem:[#allocation8 + $0x20] sm:$0xff]
    %v315 = vld [vmem:[#allocation8 + $0x28] sm:$0xff]
    %v316 = vld [vmem:[#allocation8 + $0x30] sm:$0xff]
    %v317 = vld [vmem:[#allocation8 + $0x38] sm:$0xff]
    %v318 = vld [vmem:[#allocation8 + $0x40] sm:$0xff]
    %v319 = vld [vmem:[#allocation8 + $0x48] sm:$0xff]
    %v320 = vld [vmem:[#allocation8 + $0x50] sm:$0xff]
    %v321 = vld [vmem:[#allocation8 + $0x58] sm:$0xff]
    %v322 = vld [vmem:[#allocation8 + $0x60] sm:$0xff]
    %v323 = vld [vmem:[#allocation8 + $0x68] sm:$0xff]
    %v324 = vld [vmem:[#allocation8 + $0x70] sm:$0xff]
    %v325 = vld [vmem:[#allocation8 + $0x78] sm:$0xff]
    %326 = vmatpush.msra.mxu0 0.0
    %327 = vmatpush.msra.mxu0 0.0
    %328 = vmatpush.msra.mxu0 0.0
    %329 = vmatpush.msra.mxu0 0.0
    %330 = vmatpush.msra.mxu0 0.0
    %331 = vmatpush.msra.mxu0 0.0
    %332 = vmatpush.msra.mxu0 0.0
    %333 = vmatpush.msra.mxu0 0.0
    %334 = vmatpush.msra.mxu0 %v324
    %335 = vmatpush.msra.mxu0 %v322
    %336 = vmatpush.msra.mxu0 %v320
    %337 = vmatpush.msra.mxu0 %v318
    %338 = vmatpush.msra.mxu0 %v316
    %339 = vmatpush.msra.mxu0 %v314
    %340 = vmatpush.msra.mxu0 %v312
    %341 = vmatpush.msra.mxu0 %v310
    %342 = vmatmul.f32.gmra.mxu0 %v196
    %v343 = vpop.f32.mrf.mxu0
    %v344 = vadd.f32 0.0, %v343
    %345 = vdwg.mxu0
    %346 = vmatpush.msra.mxu0 0.0
    %347 = vmatpush.msra.mxu0 0.0
    %348 = vmatpush.msra.mxu0 0.0
    %349 = vmatpush.msra.mxu0 0.0
    %350 = vmatpush.msra.mxu0 0.0
    %351 = vmatpush.msra.mxu0 0.0
    %352 = vmatpush.msra.mxu0 0.0
    %353 = vmatpush.msra.mxu0 0.0
    %354 = vmatpush.msra.mxu0 %v325
    %355 = vmatpush.msra.mxu0 %v323
    %356 = vmatpush.msra.mxu0 %v321
    %357 = vmatpush.msra.mxu0 %v319
    %358 = vmatpush.msra.mxu0 %v317
    %359 = vmatpush.msra.mxu0 %v315
    %360 = vmatpush.msra.mxu0 %v313
    %361 = vmatpush.msra.mxu0 %v311
    %362 = vmatmul.f32.gmra.mxu0 %v196
    %v363 = vpop.f32.mrf.mxu0
    %v364 = vadd.f32 0.0, %v363
    %365 = vdwg.mxu0
    %v367 = vsel %vm120, %v293, 0
    %369 = vmatpush.msra.mxu0 0.0
    %370 = vmatpush.msra.mxu0 0.0
    %371 = vmatpush.msra.mxu0 0.0
    %372 = vmatpush.msra.mxu0 0.0
    %373 = vmatpush.msra.mxu0 0.0
    %374 = vmatpush.msra.mxu0 0.0
    %375 = vmatpush.msra.mxu0 0.0
    %376 = vmatpush.msra.mxu0 0.0
    %377 = vmatpush.msra.mxu0 %v308
    %378 = vmatpush.msra.mxu0 %v306
    %379 = vmatpush.msra.mxu0 %v304
    %380 = vmatpush.msra.mxu0 %v302
    %381 = vmatpush.msra.mxu0 %v300
    %382 = vmatpush.msra.mxu0 %v298
    %383 = vmatpush.msra.mxu0 %v296
    %384 = vmatpush.msra.mxu0 %v294
    %385 = vmatmul.f32.gmra.mxu0 %v367
    %v386 = vpop.f32.mrf.mxu0
    %v387 = vadd.f32 %v344, %v386
    %388 = vdwg.mxu0
    %389 = vmatpush.msra.mxu0 0.0
    %390 = vmatpush.msra.mxu0 0.0
    %391 = vmatpush.msra.mxu0 0.0
    %392 = vmatpush.msra.mxu0 0.0
    %393 = vmatpush.msra.mxu0 0.0
    %394 = vmatpush.msra.mxu0 0.0
    %395 = vmatpush.msra.mxu0 0.0
    %396 = vmatpush.msra.mxu0 0.0
    %397 = vmatpush.msra.mxu0 %v309
    %398 = vmatpush.msra.mxu0 %v307
    %399 = vmatpush.msra.mxu0 %v305
    %400 = vmatpush.msra.mxu0 %v303
    %401 = vmatpush.msra.mxu0 %v301
    %402 = vmatpush.msra.mxu0 %v299
    %403 = vmatpush.msra.mxu0 %v297
    %404 = vmatpush.msra.mxu0 %v295
    %405 = vmatmul.f32.gmra.mxu0 %v367
    %v406 = vpop.f32.mrf.mxu0
    %v407 = vadd.f32 %v364, %v406
    %408 = vdwg.mxu0
    %v409 = vadd.f32 %v387, %v175
    %v410 = vadd.f32 %v407, %v176
    %v411 = vxor.u32 %v409, 2147483648
    %v412 = vxor.u32 %v410, 2147483648
    %v413 = vmul.f32 %v411, 1.442695
    %v414 = vpow.pop %v413
    %v415 = vmul.f32 %v412, 1.442695
    %v416 = vpow.pop %v415
    %v417 = vadd.f32 %v414, 1.0
    %v418 = vadd.f32 %v416, 1.0
    %v419 = vrcp.pop %v417
    %v420 = vmul.f32 %v417, %v419
    %v421 = vsub.f32 1.0, %v420
    %v422 = vmul.f32 %v419, %v421
    %v423 = vadd.f32 %v419, %v422
    %vm424 = vweird.f32 %v417
    %vm425 = vweird.f32 %v419
    %vm426 = vmor %vm424, %vm425
    %v427 = vsel %vm426, %v419, %v423
    %v428 = vand.u32 2147483647, %v417
    %vm429 = vcmp.eq.f32.partialorder %v428, 8.507059e+37
    %v430 = vand.u32 %v417, 2147483648
    %v431 = vor.u32 1.1754944e-38, %v430
    %v432 = vsel %vm429, %v431, %v427
    %v433 = vmul.f32 1.0, %v432
    %v434 = vrcp.pop %v418
    %v435 = vmul.f32 %v418, %v434
    %v436 = vsub.f32 1.0, %v435
    %v437 = vmul.f32 %v434, %v436
    %v438 = vadd.f32 %v434, %v437
    %vm439 = vweird.f32 %v418
    %vm440 = vweird.f32 %v434
    %vm441 = vmor %vm439, %vm440
    %v442 = vsel %vm441, %v434, %v438
    %v443 = vand.u32 2147483647, %v418
    %vm444 = vcmp.eq.f32.partialorder %v443, 8.507059e+37
    %v445 = vand.u32 %v418, 2147483648
    %v446 = vor.u32 1.1754944e-38, %v445
    %v447 = vsel %vm444, %v446, %v442
    %v448 = vmul.f32 1.0, %v447
    %v449 = vtanh.pop %v410
    %v450 = vmul.f32 %v433, 0.0
    %452 = vrot.lane.b32.xlu0 %v449, 64
    %v453 = vpop.permute.xlu0 %452
    %v455 = vmul.f32 %v433, %v453
    %457 = vrot.lane.b32.xlu0 %v455, 64
    %v458 = vpop.permute.xlu0 %457
    %v460 = vadd.f32 %v450, %v458
    %v461 = vtanh.pop %v460
    %463 = vrot.lane.b32.xlu0 %v461, 64
    %v464 = vpop.permute.xlu0 %463
    %v466 = vmul.f32 %v448, %v464
    %v469 = vrot.slane %v145, 2
    %v470 = vrot.slane %v168, 2
    %473 = vmatpush.msra.mxu0 0.0
    %474 = vmatpush.msra.mxu0 0.0
    %475 = vmatpush.msra.mxu0 0.0
    %476 = vmatpush.msra.mxu0 0.0
    %477 = vmatpush.msra.mxu0 0.0
    %478 = vmatpush.msra.mxu0 0.0
    %479 = vmatpush.msra.mxu0 0.0
    %480 = vmatpush.msra.mxu0 0.0
    %481 = vmatpush.msra.mxu0 %v193
    %482 = vmatpush.msra.mxu0 %v191
    %483 = vmatpush.msra.mxu0 %v189
    %484 = vmatpush.msra.mxu0 %v187
    %485 = vmatpush.msra.mxu0 %v185
    %486 = vmatpush.msra.mxu0 %v183
    %487 = vmatpush.msra.mxu0 %v181
    %488 = vmatpush.msra.mxu0 %v179
    %489 = vmatmul.f32.gmra.mxu0 %v367
    %v490 = vpop.f32.mrf.mxu0
    %v491 = vadd.f32 %v469, %v490
    %492 = vdwg.mxu0
    %493 = vmatpush.msra.mxu0 0.0
    %494 = vmatpush.msra.mxu0 0.0
    %495 = vmatpush.msra.mxu0 0.0
    %496 = vmatpush.msra.mxu0 0.0
    %497 = vmatpush.msra.mxu0 0.0
    %498 = vmatpush.msra.mxu0 0.0
    %499 = vmatpush.msra.mxu0 0.0
    %500 = vmatpush.msra.mxu0 0.0
    %501 = vmatpush.msra.mxu0 %v194
    %502 = vmatpush.msra.mxu0 %v192
    %503 = vmatpush.msra.mxu0 %v190
    %504 = vmatpush.msra.mxu0 %v188
    %505 = vmatpush.msra.mxu0 %v186
    %506 = vmatpush.msra.mxu0 %v184
    %507 = vmatpush.msra.mxu0 %v182
    %508 = vmatpush.msra.mxu0 %v180
    %509 = vmatmul.f32.gmra.mxu0 %v367
    %v510 = vpop.f32.mrf.mxu0
    %v511 = vadd.f32 %v470, %v510
    %512 = vdwg.mxu0
    %v513 = vxor.u32 %v491, 2147483648
    %v514 = vxor.u32 %v511, 2147483648
    %v515 = vmul.f32 %v513, 1.442695
    %v516 = vpow.pop %v515
    %v517 = vmul.f32 %v514, 1.442695
    %v518 = vpow.pop %v517
    %v519 = vadd.f32 %v516, 1.0
    %v520 = vadd.f32 %v518, 1.0
    %v521 = vrcp.pop %v519
    %v522 = vmul.f32 %v519, %v521
    %v523 = vsub.f32 1.0, %v522
    %v524 = vmul.f32 %v521, %v523
    %v525 = vadd.f32 %v521, %v524
    %vm526 = vweird.f32 %v519
    %vm527 = vweird.f32 %v521
    %vm528 = vmor %vm526, %vm527
    %v529 = vsel %vm528, %v521, %v525
    %v530 = vand.u32 2147483647, %v519
    %vm531 = vcmp.eq.f32.partialorder %v530, 8.507059e+37
    %v532 = vand.u32 %v519, 2147483648
    %v533 = vor.u32 1.1754944e-38, %v532
    %v534 = vsel %vm531, %v533, %v529
    %v535 = vmul.f32 1.0, %v534
    %v536 = vrcp.pop %v520
    %v537 = vmul.f32 %v520, %v536
    %v538 = vsub.f32 1.0, %v537
    %v539 = vmul.f32 %v536, %v538
    %v540 = vadd.f32 %v536, %v539
    %vm541 = vweird.f32 %v520
    %vm542 = vweird.f32 %v536
    %vm543 = vmor %vm541, %vm542
    %v544 = vsel %vm543, %v536, %v540
    %v545 = vand.u32 2147483647, %v520
    %vm546 = vcmp.eq.f32.partialorder %v545, 8.507059e+37
    %v547 = vand.u32 %v520, 2147483648
    %v548 = vor.u32 1.1754944e-38, %v547
    %v549 = vsel %vm546, %v548, %v544
    %v550 = vmul.f32 1.0, %v549
    %v551 = vtanh.pop %v511
    %v552 = vmul.f32 %v535, %v287
    %554 = vrot.lane.b32.xlu0 %v551, 64
    %v555 = vpop.permute.xlu0 %554
    %v557 = vmul.f32 %v535, %v555
    %559 = vrot.lane.b32.xlu0 %v557, 64
    %v560 = vpop.permute.xlu0 %559
    %v562 = vadd.f32 %v552, %v560
    %v563 = vtanh.pop %v562
    %565 = vrot.lane.b32.xlu0 %v563, 64
    %v566 = vpop.permute.xlu0 %565
    %v568 = vmul.f32 %v550, %v566
    %v570 = vsel %vm120, %v466, 0
    %572 = vmatpush.msra.mxu0 0.0
    %573 = vmatpush.msra.mxu0 0.0
    %574 = vmatpush.msra.mxu0 0.0
    %575 = vmatpush.msra.mxu0 0.0
    %576 = vmatpush.msra.mxu0 0.0
    %577 = vmatpush.msra.mxu0 0.0
    %578 = vmatpush.msra.mxu0 0.0
    %579 = vmatpush.msra.mxu0 0.0
    %580 = vmatpush.msra.mxu0 %v324
    %581 = vmatpush.msra.mxu0 %v322
    %582 = vmatpush.msra.mxu0 %v320
    %583 = vmatpush.msra.mxu0 %v318
    %584 = vmatpush.msra.mxu0 %v316
    %585 = vmatpush.msra.mxu0 %v314
    %586 = vmatpush.msra.mxu0 %v312
    %587 = vmatpush.msra.mxu0 %v310
    %588 = vmatmul.f32.gmra.mxu0 %v570
    %v589 = vpop.f32.mrf.mxu0
    %v590 = vadd.f32 0.0, %v589
    %591 = vdwg.mxu0
    %592 = vmatpush.msra.mxu0 0.0
    %593 = vmatpush.msra.mxu0 0.0
    %594 = vmatpush.msra.mxu0 0.0
    %595 = vmatpush.msra.mxu0 0.0
    %596 = vmatpush.msra.mxu0 0.0
    %597 = vmatpush.msra.mxu0 0.0
    %598 = vmatpush.msra.mxu0 0.0
    %599 = vmatpush.msra.mxu0 0.0
    %600 = vmatpush.msra.mxu0 %v325
    %601 = vmatpush.msra.mxu0 %v323
    %602 = vmatpush.msra.mxu0 %v321
    %603 = vmatpush.msra.mxu0 %v319
    %604 = vmatpush.msra.mxu0 %v317
    %605 = vmatpush.msra.mxu0 %v315
    %606 = vmatpush.msra.mxu0 %v313
    %607 = vmatpush.msra.mxu0 %v311
    %608 = vmatmul.f32.gmra.mxu0 %v570
    %v609 = vpop.f32.mrf.mxu0
    %v610 = vadd.f32 0.0, %v609
    %611 = vdwg.mxu0
    %v613 = vsel %vm120, %v568, 0
    %615 = vmatpush.msra.mxu0 0.0
    %616 = vmatpush.msra.mxu0 0.0
    %617 = vmatpush.msra.mxu0 0.0
    %618 = vmatpush.msra.mxu0 0.0
    %619 = vmatpush.msra.mxu0 0.0
    %620 = vmatpush.msra.mxu0 0.0
    %621 = vmatpush.msra.mxu0 0.0
    %622 = vmatpush.msra.mxu0 0.0
    %623 = vmatpush.msra.mxu0 %v308
    %624 = vmatpush.msra.mxu0 %v306
    %625 = vmatpush.msra.mxu0 %v304
    %626 = vmatpush.msra.mxu0 %v302
    %627 = vmatpush.msra.mxu0 %v300
    %628 = vmatpush.msra.mxu0 %v298
    %629 = vmatpush.msra.mxu0 %v296
    %630 = vmatpush.msra.mxu0 %v294
    %631 = vmatmul.f32.gmra.mxu0 %v613
    %v632 = vpop.f32.mrf.mxu0
    %v633 = vadd.f32 %v590, %v632
    %634 = vdwg.mxu0
    %635 = vmatpush.msra.mxu0 0.0
    %636 = vmatpush.msra.mxu0 0.0
    %637 = vmatpush.msra.mxu0 0.0
    %638 = vmatpush.msra.mxu0 0.0
    %639 = vmatpush.msra.mxu0 0.0
    %640 = vmatpush.msra.mxu0 0.0
    %641 = vmatpush.msra.mxu0 0.0
    %642 = vmatpush.msra.mxu0 0.0
    %643 = vmatpush.msra.mxu0 %v309
    %644 = vmatpush.msra.mxu0 %v307
    %645 = vmatpush.msra.mxu0 %v305
    %646 = vmatpush.msra.mxu0 %v303
    %647 = vmatpush.msra.mxu0 %v301
    %648 = vmatpush.msra.mxu0 %v299
    %649 = vmatpush.msra.mxu0 %v297
    %650 = vmatpush.msra.mxu0 %v295
    %651 = vmatmul.f32.gmra.mxu0 %v613
    %v652 = vpop.f32.mrf.mxu0
    %v653 = vadd.f32 %v610, %v652
    %654 = vdwg.mxu0
    %v655 = vadd.f32 %v633, %v175
    %v656 = vadd.f32 %v653, %v176
    %v657 = vxor.u32 %v655, 2147483648
    %v658 = vxor.u32 %v656, 2147483648
    %v659 = vmul.f32 %v657, 1.442695
    %v660 = vpow.pop %v659
    %v661 = vmul.f32 %v658, 1.442695
    %v662 = vpow.pop %v661
    %v663 = vadd.f32 %v660, 1.0
    %v664 = vadd.f32 %v662, 1.0
    %v665 = vrcp.pop %v663
    %v666 = vmul.f32 %v663, %v665
    %v667 = vsub.f32 1.0, %v666
    %v668 = vmul.f32 %v665, %v667
    %v669 = vadd.f32 %v665, %v668
    %vm670 = vweird.f32 %v663
    %vm671 = vweird.f32 %v665
    %vm672 = vmor %vm670, %vm671
    %v673 = vsel %vm672, %v665, %v669
    %v674 = vand.u32 2147483647, %v663
    %vm675 = vcmp.eq.f32.partialorder %v674, 8.507059e+37
    %v676 = vand.u32 %v663, 2147483648
    %v677 = vor.u32 1.1754944e-38, %v676
    %v678 = vsel %vm675, %v677, %v673
    %v679 = vmul.f32 1.0, %v678
    %v680 = vrcp.pop %v664
    %v681 = vmul.f32 %v664, %v680
    %v682 = vsub.f32 1.0, %v681
    %v683 = vmul.f32 %v680, %v682
    %v684 = vadd.f32 %v680, %v683
    %vm685 = vweird.f32 %v664
    %vm686 = vweird.f32 %v680
    %vm687 = vmor %vm685, %vm686
    %v688 = vsel %vm687, %v680, %v684
    %v689 = vand.u32 2147483647, %v664
    %vm690 = vcmp.eq.f32.partialorder %v689, 8.507059e+37
    %v691 = vand.u32 %v664, 2147483648
    %v692 = vor.u32 1.1754944e-38, %v691
    %v693 = vsel %vm690, %v692, %v688
    %v694 = vmul.f32 1.0, %v693
    %v695 = vtanh.pop %v656
    %v696 = vmul.f32 %v679, %v460
    %698 = vrot.lane.b32.xlu0 %v695, 64
    %v699 = vpop.permute.xlu0 %698
    %v701 = vmul.f32 %v679, %v699
    %703 = vrot.lane.b32.xlu0 %v701, 64
    %v704 = vpop.permute.xlu0 %703
    %v706 = vadd.f32 %v696, %v704
    %v707 = vtanh.pop %v706
    %709 = vrot.lane.b32.xlu0 %v707, 64
    %v710 = vpop.permute.xlu0 %709
    %v712 = vmul.f32 %v694, %v710
    %v713 = vrot.slane %v145, 4
    %v714 = vrot.slane %v168, 4
    %717 = vmatpush.msra.mxu0 0.0
    %718 = vmatpush.msra.mxu0 0.0
    %719 = vmatpush.msra.mxu0 0.0
    %720 = vmatpush.msra.mxu0 0.0
    %721 = vmatpush.msra.mxu0 0.0
    %722 = vmatpush.msra.mxu0 0.0
    %723 = vmatpush.msra.mxu0 0.0
    %724 = vmatpush.msra.mxu0 0.0
    %725 = vmatpush.msra.mxu0 %v193
    %726 = vmatpush.msra.mxu0 %v191
    %727 = vmatpush.msra.mxu0 %v189
    %728 = vmatpush.msra.mxu0 %v187
    %729 = vmatpush.msra.mxu0 %v185
    %730 = vmatpush.msra.mxu0 %v183
    %731 = vmatpush.msra.mxu0 %v181
    %732 = vmatpush.msra.mxu0 %v179
    %733 = vmatmul.f32.gmra.mxu0 %v613
    %v734 = vpop.f32.mrf.mxu0
    %v735 = vadd.f32 %v713, %v734
    %736 = vdwg.mxu0
    %737 = vmatpush.msra.mxu0 0.0
    %738 = vmatpush.msra.mxu0 0.0
    %739 = vmatpush.msra.mxu0 0.0
    %740 = vmatpush.msra.mxu0 0.0
    %741 = vmatpush.msra.mxu0 0.0
    %742 = vmatpush.msra.mxu0 0.0
    %743 = vmatpush.msra.mxu0 0.0
    %744 = vmatpush.msra.mxu0 0.0
    %745 = vmatpush.msra.mxu0 %v194
    %746 = vmatpush.msra.mxu0 %v192
    %747 = vmatpush.msra.mxu0 %v190
    %748 = vmatpush.msra.mxu0 %v188
    %749 = vmatpush.msra.mxu0 %v186
    %750 = vmatpush.msra.mxu0 %v184
    %751 = vmatpush.msra.mxu0 %v182
    %752 = vmatpush.msra.mxu0 %v180
    %753 = vmatmul.f32.gmra.mxu0 %v613
    %v754 = vpop.f32.mrf.mxu0
    %v755 = vadd.f32 %v714, %v754
    %756 = vdwg.mxu0
    %v757 = vxor.u32 %v735, 2147483648
    %v758 = vxor.u32 %v755, 2147483648
    %v759 = vmul.f32 %v757, 1.442695
    %v760 = vpow.pop %v759
    %v761 = vmul.f32 %v758, 1.442695
    %v762 = vpow.pop %v761
    %v763 = vadd.f32 %v760, 1.0
    %v764 = vadd.f32 %v762, 1.0
    %v765 = vrcp.pop %v763
    %v766 = vmul.f32 %v763, %v765
    %v767 = vsub.f32 1.0, %v766
    %v768 = vmul.f32 %v765, %v767
    %v769 = vadd.f32 %v765, %v768
    %vm770 = vweird.f32 %v763
    %vm771 = vweird.f32 %v765
    %vm772 = vmor %vm770, %vm771
    %v773 = vsel %vm772, %v765, %v769
    %v774 = vand.u32 2147483647, %v763
    %vm775 = vcmp.eq.f32.partialorder %v774, 8.507059e+37
    %v776 = vand.u32 %v763, 2147483648
    %v777 = vor.u32 1.1754944e-38, %v776
    %v778 = vsel %vm775, %v777, %v773
    %v779 = vmul.f32 1.0, %v778
    %v780 = vrcp.pop %v764
    %v781 = vmul.f32 %v764, %v780
    %v782 = vsub.f32 1.0, %v781
    %v783 = vmul.f32 %v780, %v782
    %v784 = vadd.f32 %v780, %v783
    %vm785 = vweird.f32 %v764
    %vm786 = vweird.f32 %v780
    %vm787 = vmor %vm785, %vm786
    %v788 = vsel %vm787, %v780, %v784
    %v789 = vand.u32 2147483647, %v764
    %vm790 = vcmp.eq.f32.partialorder %v789, 8.507059e+37
    %v791 = vand.u32 %v764, 2147483648
    %v792 = vor.u32 1.1754944e-38, %v791
    %v793 = vsel %vm790, %v792, %v788
    %v794 = vmul.f32 1.0, %v793
    %v795 = vtanh.pop %v755
    %v796 = vmul.f32 %v779, %v562
    %798 = vrot.lane.b32.xlu0 %v795, 64
    %v799 = vpop.permute.xlu0 %798
    %v801 = vmul.f32 %v779, %v799
    %803 = vrot.lane.b32.xlu0 %v801, 64
    %v804 = vpop.permute.xlu0 %803
    %v806 = vadd.f32 %v796, %v804
    %v807 = vtanh.pop %v806
    %809 = vrot.lane.b32.xlu0 %v807, 64
    %v810 = vpop.permute.xlu0 %809
    %v812 = vmul.f32 %v794, %v810
    %v814 = vsel %vm120, %v712, 0
    %816 = vmatpush.msra.mxu0 0.0
    %817 = vmatpush.msra.mxu0 0.0
    %818 = vmatpush.msra.mxu0 0.0
    %819 = vmatpush.msra.mxu0 0.0
    %820 = vmatpush.msra.mxu0 0.0
    %821 = vmatpush.msra.mxu0 0.0
    %822 = vmatpush.msra.mxu0 0.0
    %823 = vmatpush.msra.mxu0 0.0
    %824 = vmatpush.msra.mxu0 %v324
    %825 = vmatpush.msra.mxu0 %v322
    %826 = vmatpush.msra.mxu0 %v320
    %827 = vmatpush.msra.mxu0 %v318
    %828 = vmatpush.msra.mxu0 %v316
    %829 = vmatpush.msra.mxu0 %v314
    %830 = vmatpush.msra.mxu0 %v312
    %831 = vmatpush.msra.mxu0 %v310
    %832 = vmatmul.f32.gmra.mxu0 %v814
    %v833 = vpop.f32.mrf.mxu0
    %v834 = vadd.f32 0.0, %v833
    %835 = vdwg.mxu0
    %836 = vmatpush.msra.mxu0 0.0
    %837 = vmatpush.msra.mxu0 0.0
    %838 = vmatpush.msra.mxu0 0.0
    %839 = vmatpush.msra.mxu0 0.0
    %840 = vmatpush.msra.mxu0 0.0
    %841 = vmatpush.msra.mxu0 0.0
    %842 = vmatpush.msra.mxu0 0.0
    %843 = vmatpush.msra.mxu0 0.0
    %844 = vmatpush.msra.mxu0 %v325
    %845 = vmatpush.msra.mxu0 %v323
    %846 = vmatpush.msra.mxu0 %v321
    %847 = vmatpush.msra.mxu0 %v319
    %848 = vmatpush.msra.mxu0 %v317
    %849 = vmatpush.msra.mxu0 %v315
    %850 = vmatpush.msra.mxu0 %v313
    %851 = vmatpush.msra.mxu0 %v311
    %852 = vmatmul.f32.gmra.mxu0 %v814
    %v853 = vpop.f32.mrf.mxu0
    %v854 = vadd.f32 0.0, %v853
    %855 = vdwg.mxu0
    %v857 = vsel %vm120, %v812, 0
    %859 = vmatpush.msra.mxu0 0.0
    %860 = vmatpush.msra.mxu0 0.0
    %861 = vmatpush.msra.mxu0 0.0
    %862 = vmatpush.msra.mxu0 0.0
    %863 = vmatpush.msra.mxu0 0.0
    %864 = vmatpush.msra.mxu0 0.0
    %865 = vmatpush.msra.mxu0 0.0
    %866 = vmatpush.msra.mxu0 0.0
    %867 = vmatpush.msra.mxu0 %v308
    %868 = vmatpush.msra.mxu0 %v306
    %869 = vmatpush.msra.mxu0 %v304
    %870 = vmatpush.msra.mxu0 %v302
    %871 = vmatpush.msra.mxu0 %v300
    %872 = vmatpush.msra.mxu0 %v298
    %873 = vmatpush.msra.mxu0 %v296
    %874 = vmatpush.msra.mxu0 %v294
    %875 = vmatmul.f32.gmra.mxu0 %v857
    %v876 = vpop.f32.mrf.mxu0
    %v877 = vadd.f32 %v834, %v876
    %878 = vdwg.mxu0
    %879 = vmatpush.msra.mxu0 0.0
    %880 = vmatpush.msra.mxu0 0.0
    %881 = vmatpush.msra.mxu0 0.0
    %882 = vmatpush.msra.mxu0 0.0
    %883 = vmatpush.msra.mxu0 0.0
    %884 = vmatpush.msra.mxu0 0.0
    %885 = vmatpush.msra.mxu0 0.0
    %886 = vmatpush.msra.mxu0 0.0
    %887 = vmatpush.msra.mxu0 %v309
    %888 = vmatpush.msra.mxu0 %v307
    %889 = vmatpush.msra.mxu0 %v305
    %890 = vmatpush.msra.mxu0 %v303
    %891 = vmatpush.msra.mxu0 %v301
    %892 = vmatpush.msra.mxu0 %v299
    %893 = vmatpush.msra.mxu0 %v297
    %894 = vmatpush.msra.mxu0 %v295
    %895 = vmatmul.f32.gmra.mxu0 %v857
    %v896 = vpop.f32.mrf.mxu0
    %v897 = vadd.f32 %v854, %v896
    %898 = vdwg.mxu0
    %v899 = vadd.f32 %v877, %v175
    %v900 = vadd.f32 %v897, %v176
    %v901 = vxor.u32 %v899, 2147483648
    %v902 = vxor.u32 %v900, 2147483648
    %v903 = vmul.f32 %v901, 1.442695
    %v904 = vpow.pop %v903
    %v905 = vmul.f32 %v902, 1.442695
    %v906 = vpow.pop %v905
    %v907 = vadd.f32 %v904, 1.0
    %v908 = vadd.f32 %v906, 1.0
    %v909 = vrcp.pop %v907
    %v910 = vmul.f32 %v907, %v909
    %v911 = vsub.f32 1.0, %v910
    %v912 = vmul.f32 %v909, %v911
    %v913 = vadd.f32 %v909, %v912
    %vm914 = vweird.f32 %v907
    %vm915 = vweird.f32 %v909
    %vm916 = vmor %vm914, %vm915
    %v917 = vsel %vm916, %v909, %v913
    %v918 = vand.u32 2147483647, %v907
    %vm919 = vcmp.eq.f32.partialorder %v918, 8.507059e+37
    %v920 = vand.u32 %v907, 2147483648
    %v921 = vor.u32 1.1754944e-38, %v920
    %v922 = vsel %vm919, %v921, %v917
    %v923 = vmul.f32 1.0, %v922
    %v924 = vrcp.pop %v908
    %v925 = vmul.f32 %v908, %v924
    %v926 = vsub.f32 1.0, %v925
    %v927 = vmul.f32 %v924, %v926
    %v928 = vadd.f32 %v924, %v927
    %vm929 = vweird.f32 %v908
    %vm930 = vweird.f32 %v924
    %vm931 = vmor %vm929, %vm930
    %v932 = vsel %vm931, %v924, %v928
    %v933 = vand.u32 2147483647, %v908
    %vm934 = vcmp.eq.f32.partialorder %v933, 8.507059e+37
    %v935 = vand.u32 %v908, 2147483648
    %v936 = vor.u32 1.1754944e-38, %v935
    %v937 = vsel %vm934, %v936, %v932
    %v938 = vmul.f32 1.0, %v937
    %v939 = vtanh.pop %v900
    %v940 = vmul.f32 %v923, %v706
    %942 = vrot.lane.b32.xlu0 %v939, 64
    %v943 = vpop.permute.xlu0 %942
    %v945 = vmul.f32 %v923, %v943
    %947 = vrot.lane.b32.xlu0 %v945, 64
    %v948 = vpop.permute.xlu0 %947
    %v950 = vadd.f32 %v940, %v948
    %v951 = vtanh.pop %v950
    %953 = vrot.lane.b32.xlu0 %v951, 64
    %v954 = vpop.permute.xlu0 %953
    %v956 = vmul.f32 %v938, %v954
    %v957 = vrot.slane %v145, 6
    %v958 = vrot.slane %v168, 6
    %961 = vmatpush.msra.mxu0 0.0
    %962 = vmatpush.msra.mxu0 0.0
    %963 = vmatpush.msra.mxu0 0.0
    %964 = vmatpush.msra.mxu0 0.0
    %965 = vmatpush.msra.mxu0 0.0
    %966 = vmatpush.msra.mxu0 0.0
    %967 = vmatpush.msra.mxu0 0.0
    %968 = vmatpush.msra.mxu0 0.0
    %969 = vmatpush.msra.mxu0 %v193
    %970 = vmatpush.msra.mxu0 %v191
    %971 = vmatpush.msra.mxu0 %v189
    %972 = vmatpush.msra.mxu0 %v187
    %973 = vmatpush.msra.mxu0 %v185
    %974 = vmatpush.msra.mxu0 %v183
    %975 = vmatpush.msra.mxu0 %v181
    %976 = vmatpush.msra.mxu0 %v179
    %977 = vmatmul.f32.gmra.mxu0 %v857
    %v978 = vpop.f32.mrf.mxu0
    %v979 = vadd.f32 %v957, %v978
    %980 = vdwg.mxu0
    %981 = vmatpush.msra.mxu0 0.0
    %982 = vmatpush.msra.mxu0 0.0
    %983 = vmatpush.msra.mxu0 0.0
    %984 = vmatpush.msra.mxu0 0.0
    %985 = vmatpush.msra.mxu0 0.0
    %986 = vmatpush.msra.mxu0 0.0
    %987 = vmatpush.msra.mxu0 0.0
    %988 = vmatpush.msra.mxu0 0.0
    %989 = vmatpush.msra.mxu0 %v194
    %990 = vmatpush.msra.mxu0 %v192
    %991 = vmatpush.msra.mxu0 %v190
    %992 = vmatpush.msra.mxu0 %v188
    %993 = vmatpush.msra.mxu0 %v186
    %994 = vmatpush.msra.mxu0 %v184
    %995 = vmatpush.msra.mxu0 %v182
    %996 = vmatpush.msra.mxu0 %v180
    %997 = vmatmul.f32.gmra.mxu0 %v857
    %v998 = vpop.f32.mrf.mxu0
    %v999 = vadd.f32 %v958, %v998
    %1000 = vdwg.mxu0
    %v1001 = vxor.u32 %v979, 2147483648
    %v1002 = vxor.u32 %v999, 2147483648
    %v1003 = vmul.f32 %v1001, 1.442695
    %v1004 = vpow.pop %v1003
    %v1005 = vmul.f32 %v1002, 1.442695
    %v1006 = vpow.pop %v1005
    %v1007 = vadd.f32 %v1004, 1.0
    %v1008 = vadd.f32 %v1006, 1.0
    %v1009 = vrcp.pop %v1007
    %v1010 = vmul.f32 %v1007, %v1009
    %v1011 = vsub.f32 1.0, %v1010
    %v1012 = vmul.f32 %v1009, %v1011
    %v1013 = vadd.f32 %v1009, %v1012
    %vm1014 = vweird.f32 %v1007
    %vm1015 = vweird.f32 %v1009
    %vm1016 = vmor %vm1014, %vm1015
    %v1017 = vsel %vm1016, %v1009, %v1013
    %v1018 = vand.u32 2147483647, %v1007
    %vm1019 = vcmp.eq.f32.partialorder %v1018, 8.507059e+37
    %v1020 = vand.u32 %v1007, 2147483648
    %v1021 = vor.u32 1.1754944e-38, %v1020
    %v1022 = vsel %vm1019, %v1021, %v1017
    %v1023 = vmul.f32 1.0, %v1022
    %v1024 = vrcp.pop %v1008
    %v1025 = vmul.f32 %v1008, %v1024
    %v1026 = vsub.f32 1.0, %v1025
    %v1027 = vmul.f32 %v1024, %v1026
    %v1028 = vadd.f32 %v1024, %v1027
    %vm1029 = vweird.f32 %v1008
    %vm1030 = vweird.f32 %v1024
    %vm1031 = vmor %vm1029, %vm1030
    %v1032 = vsel %vm1031, %v1024, %v1028
    %v1033 = vand.u32 2147483647, %v1008
    %vm1034 = vcmp.eq.f32.partialorder %v1033, 8.507059e+37
    %v1035 = vand.u32 %v1008, 2147483648
    %v1036 = vor.u32 1.1754944e-38, %v1035
    %v1037 = vsel %vm1034, %v1036, %v1032
    %v1038 = vmul.f32 1.0, %v1037
    %v1039 = vtanh.pop %v999
    %v1040 = vmul.f32 %v1023, %v806
    %1042 = vrot.lane.b32.xlu0 %v1039, 64
    %v1043 = vpop.permute.xlu0 %1042
    %v1045 = vmul.f32 %v1023, %v1043
    %1047 = vrot.lane.b32.xlu0 %v1045, 64
    %v1048 = vpop.permute.xlu0 %1047
    %v1050 = vadd.f32 %v1040, %v1048
    %v1051 = vtanh.pop %v1050
    %1053 = vrot.lane.b32.xlu0 %v1051, 64
    %v1054 = vpop.permute.xlu0 %1053
    %v1056 = vmul.f32 %v1038, %v1054
    %v1058 = vsel %vm120, %v956, 0
    %1060 = vmatpush.msra.mxu0 0.0
    %1061 = vmatpush.msra.mxu0 0.0
    %1062 = vmatpush.msra.mxu0 0.0
    %1063 = vmatpush.msra.mxu0 0.0
    %1064 = vmatpush.msra.mxu0 0.0
    %1065 = vmatpush.msra.mxu0 0.0
    %1066 = vmatpush.msra.mxu0 0.0
    %1067 = vmatpush.msra.mxu0 0.0
    %1068 = vmatpush.msra.mxu0 %v324
    %1069 = vmatpush.msra.mxu0 %v322
    %1070 = vmatpush.msra.mxu0 %v320
    %1071 = vmatpush.msra.mxu0 %v318
    %1072 = vmatpush.msra.mxu0 %v316
    %1073 = vmatpush.msra.mxu0 %v314
    %1074 = vmatpush.msra.mxu0 %v312
    %1075 = vmatpush.msra.mxu0 %v310
    %1076 = vmatmul.f32.gmra.mxu0 %v1058
    %v1077 = vpop.f32.mrf.mxu0
    %v1078 = vadd.f32 0.0, %v1077
    %1079 = vdwg.mxu0
    %1080 = vmatpush.msra.mxu0 0.0
    %1081 = vmatpush.msra.mxu0 0.0
    %1082 = vmatpush.msra.mxu0 0.0
    %1083 = vmatpush.msra.mxu0 0.0
    %1084 = vmatpush.msra.mxu0 0.0
    %1085 = vmatpush.msra.mxu0 0.0
    %1086 = vmatpush.msra.mxu0 0.0
    %1087 = vmatpush.msra.mxu0 0.0
    %1088 = vmatpush.msra.mxu0 %v325
    %1089 = vmatpush.msra.mxu0 %v323
    %1090 = vmatpush.msra.mxu0 %v321
    %1091 = vmatpush.msra.mxu0 %v319
    %1092 = vmatpush.msra.mxu0 %v317
    %1093 = vmatpush.msra.mxu0 %v315
    %1094 = vmatpush.msra.mxu0 %v313
    %1095 = vmatpush.msra.mxu0 %v311
    %1096 = vmatmul.f32.gmra.mxu0 %v1058
    %v1097 = vpop.f32.mrf.mxu0
    %v1098 = vadd.f32 0.0, %v1097
    %1099 = vdwg.mxu0
    %v1101 = vsel %vm120, %v1056, 0
    %1103 = vmatpush.msra.mxu0 0.0
    %1104 = vmatpush.msra.mxu0 0.0
    %1105 = vmatpush.msra.mxu0 0.0
    %1106 = vmatpush.msra.mxu0 0.0
    %1107 = vmatpush.msra.mxu0 0.0
    %1108 = vmatpush.msra.mxu0 0.0
    %1109 = vmatpush.msra.mxu0 0.0
    %1110 = vmatpush.msra.mxu0 0.0
    %1111 = vmatpush.msra.mxu0 %v308
    %1112 = vmatpush.msra.mxu0 %v306
    %1113 = vmatpush.msra.mxu0 %v304
    %1114 = vmatpush.msra.mxu0 %v302
    %1115 = vmatpush.msra.mxu0 %v300
    %1116 = vmatpush.msra.mxu0 %v298
    %1117 = vmatpush.msra.mxu0 %v296
    %1118 = vmatpush.msra.mxu0 %v294
    %1119 = vmatmul.f32.gmra.mxu0 %v1101
    %v1120 = vpop.f32.mrf.mxu0
    %v1121 = vadd.f32 %v1078, %v1120
    %1122 = vdwg.mxu0
    %1123 = vmatpush.msra.mxu0 0.0
    %1124 = vmatpush.msra.mxu0 0.0
    %1125 = vmatpush.msra.mxu0 0.0
    %1126 = vmatpush.msra.mxu0 0.0
    %1127 = vmatpush.msra.mxu0 0.0
    %1128 = vmatpush.msra.mxu0 0.0
    %1129 = vmatpush.msra.mxu0 0.0
    %1130 = vmatpush.msra.mxu0 0.0
    %1131 = vmatpush.msra.mxu0 %v309
    %1132 = vmatpush.msra.mxu0 %v307
    %1133 = vmatpush.msra.mxu0 %v305
    %1134 = vmatpush.msra.mxu0 %v303
    %1135 = vmatpush.msra.mxu0 %v301
    %1136 = vmatpush.msra.mxu0 %v299
    %1137 = vmatpush.msra.mxu0 %v297
    %1138 = vmatpush.msra.mxu0 %v295
    %1139 = vmatmul.f32.gmra.mxu0 %v1101
    %v1140 = vpop.f32.mrf.mxu0
    %v1141 = vadd.f32 %v1098, %v1140
    %1142 = vdwg.mxu0
    %v1143 = vadd.f32 %v1121, %v175
    %v1144 = vadd.f32 %v1141, %v176
    %v1145 = vxor.u32 %v1143, 2147483648
    %v1146 = vxor.u32 %v1144, 2147483648
    %v1147 = vmul.f32 %v1145, 1.442695
    %v1148 = vpow.pop %v1147
    %v1149 = vmul.f32 %v1146, 1.442695
    %v1150 = vpow.pop %v1149
    %v1151 = vadd.f32 %v1148, 1.0
    %v1152 = vadd.f32 %v1150, 1.0
    %v1153 = vrcp.pop %v1151
    %v1154 = vmul.f32 %v1151, %v1153
    %v1155 = vsub.f32 1.0, %v1154
    %v1156 = vmul.f32 %v1153, %v1155
    %v1157 = vadd.f32 %v1153, %v1156
    %vm1158 = vweird.f32 %v1151
    %vm1159 = vweird.f32 %v1153
    %vm1160 = vmor %vm1158, %vm1159
    %v1161 = vsel %vm1160, %v1153, %v1157
    %v1162 = vand.u32 2147483647, %v1151
    %vm1163 = vcmp.eq.f32.partialorder %v1162, 8.507059e+37
    %v1164 = vand.u32 %v1151, 2147483648
    %v1165 = vor.u32 1.1754944e-38, %v1164
    %v1166 = vsel %vm1163, %v1165, %v1161
    %v1167 = vmul.f32 1.0, %v1166
    %v1168 = vrcp.pop %v1152
    %v1169 = vmul.f32 %v1152, %v1168
    %v1170 = vsub.f32 1.0, %v1169
    %v1171 = vmul.f32 %v1168, %v1170
    %v1172 = vadd.f32 %v1168, %v1171
    %vm1173 = vweird.f32 %v1152
    %vm1174 = vweird.f32 %v1168
    %vm1175 = vmor %vm1173, %vm1174
    %v1176 = vsel %vm1175, %v1168, %v1172
    %v1177 = vand.u32 2147483647, %v1152
    %vm1178 = vcmp.eq.f32.partialorder %v1177, 8.507059e+37
    %v1179 = vand.u32 %v1152, 2147483648
    %v1180 = vor.u32 1.1754944e-38, %v1179
    %v1181 = vsel %vm1178, %v1180, %v1176
    %v1182 = vmul.f32 1.0, %v1181
    %v1183 = vtanh.pop %v1144
    %v1184 = vmul.f32 %v1167, %v950
    %1186 = vrot.lane.b32.xlu0 %v1183, 64
    %v1187 = vpop.permute.xlu0 %1186
    %v1189 = vmul.f32 %v1167, %v1187
    %1191 = vrot.lane.b32.xlu0 %v1189, 64
    %v1192 = vpop.permute.xlu0 %1191
    %v1194 = vadd.f32 %v1184, %v1192
    %v1195 = vtanh.pop %v1194
    %1197 = vrot.lane.b32.xlu0 %v1195, 64
    %v1198 = vpop.permute.xlu0 %1197
    %v1200 = vmul.f32 %v1182, %v1198
    %1201 = vmatpush.msra.mxu0 0.0
    %1202 = vmatpush.msra.mxu0 0.0
    %1203 = vmatpush.msra.mxu0 0.0
    %1204 = vmatpush.msra.mxu0 0.0
    %1205 = vmatpush.msra.mxu0 0.0
    %1206 = vmatpush.msra.mxu0 0.0
    %1207 = vmatpush.msra.mxu0 0.0
    %1208 = vmatpush.msra.mxu0 0.0
    %1209 = vmatpush.msra.mxu0 %v193
    %1210 = vmatpush.msra.mxu0 %v191
    %1211 = vmatpush.msra.mxu0 %v189
    %1212 = vmatpush.msra.mxu0 %v187
    %1213 = vmatpush.msra.mxu0 %v185
    %1214 = vmatpush.msra.mxu0 %v183
    %1215 = vmatpush.msra.mxu0 %v181
    %1216 = vmatpush.msra.mxu0 %v179
    %1217 = vmatmul.f32.gmra.mxu0 %v1101
    %v1218 = vpop.f32.mrf.mxu0
    %v1219 = vadd.f32 %v148, %v1218
    %1220 = vdwg.mxu0
    %1221 = vmatpush.msra.mxu0 0.0
    %1222 = vmatpush.msra.mxu0 0.0
    %1223 = vmatpush.msra.mxu0 0.0
    %1224 = vmatpush.msra.mxu0 0.0
    %1225 = vmatpush.msra.mxu0 0.0
    %1226 = vmatpush.msra.mxu0 0.0
    %1227 = vmatpush.msra.mxu0 0.0
    %1228 = vmatpush.msra.mxu0 0.0
    %1229 = vmatpush.msra.mxu0 %v194
    %1230 = vmatpush.msra.mxu0 %v192
    %1231 = vmatpush.msra.mxu0 %v190
    %1232 = vmatpush.msra.mxu0 %v188
    %1233 = vmatpush.msra.mxu0 %v186
    %1234 = vmatpush.msra.mxu0 %v184
    %1235 = vmatpush.msra.mxu0 %v182
    %1236 = vmatpush.msra.mxu0 %v180
    %1237 = vmatmul.f32.gmra.mxu0 %v1101
    %v1238 = vpop.f32.mrf.mxu0
    %v1239 = vadd.f32 %v171, %v1238
    %1240 = vdwg.mxu0
    %v1241 = vxor.u32 %v1219, 2147483648
    %v1242 = vxor.u32 %v1239, 2147483648
    %v1243 = vmul.f32 %v1241, 1.442695
    %v1244 = vpow.pop %v1243
    %v1245 = vmul.f32 %v1242, 1.442695
    %v1246 = vpow.pop %v1245
    %v1247 = vadd.f32 %v1244, 1.0
    %v1248 = vadd.f32 %v1246, 1.0
    %v1249 = vrcp.pop %v1247
    %v1250 = vmul.f32 %v1247, %v1249
    %v1251 = vsub.f32 1.0, %v1250
    %v1252 = vmul.f32 %v1249, %v1251
    %v1253 = vadd.f32 %v1249, %v1252
    %vm1254 = vweird.f32 %v1247
    %vm1255 = vweird.f32 %v1249
    %vm1256 = vmor %vm1254, %vm1255
    %v1257 = vsel %vm1256, %v1249, %v1253
    %v1258 = vand.u32 2147483647, %v1247
    %vm1259 = vcmp.eq.f32.partialorder %v1258, 8.507059e+37
    %v1260 = vand.u32 %v1247, 2147483648
    %v1261 = vor.u32 1.1754944e-38, %v1260
    %v1262 = vsel %vm1259, %v1261, %v1257
    %v1263 = vmul.f32 1.0, %v1262
    %v1264 = vrcp.pop %v1248
    %v1265 = vmul.f32 %v1248, %v1264
    %v1266 = vsub.f32 1.0, %v1265
    %v1267 = vmul.f32 %v1264, %v1266
    %v1268 = vadd.f32 %v1264, %v1267
    %vm1269 = vweird.f32 %v1248
    %vm1270 = vweird.f32 %v1264
    %vm1271 = vmor %vm1269, %vm1270
    %v1272 = vsel %vm1271, %v1264, %v1268
    %v1273 = vand.u32 2147483647, %v1248
    %vm1274 = vcmp.eq.f32.partialorder %v1273, 8.507059e+37
    %v1275 = vand.u32 %v1248, 2147483648
    %v1276 = vor.u32 1.1754944e-38, %v1275
    %v1277 = vsel %vm1274, %v1276, %v1272
    %v1278 = vmul.f32 1.0, %v1277
    %v1279 = vtanh.pop %v1239
    %v1280 = vmul.f32 %v1263, %v1050
    %1282 = vrot.lane.b32.xlu0 %v1279, 64
    %v1283 = vpop.permute.xlu0 %1282
    %v1285 = vmul.f32 %v1263, %v1283
    %1287 = vrot.lane.b32.xlu0 %v1285, 64
    %v1288 = vpop.permute.xlu0 %1287
    %v1290 = vadd.f32 %v1280, %v1288
    %v1291 = vtanh.pop %v1290
    %1293 = vrot.lane.b32.xlu0 %v1291, 64
    %v1294 = vpop.permute.xlu0 %1293
    %v1296 = vmul.f32 %v1278, %v1294
    %v1298 = vsel %vm120, %v1200, 0
    %1300 = vmatpush.msra.mxu0 0.0
    %1301 = vmatpush.msra.mxu0 0.0
    %1302 = vmatpush.msra.mxu0 0.0
    %1303 = vmatpush.msra.mxu0 0.0
    %1304 = vmatpush.msra.mxu0 0.0
    %1305 = vmatpush.msra.mxu0 0.0
    %1306 = vmatpush.msra.mxu0 0.0
    %1307 = vmatpush.msra.mxu0 0.0
    %1308 = vmatpush.msra.mxu0 %v324
    %1309 = vmatpush.msra.mxu0 %v322
    %1310 = vmatpush.msra.mxu0 %v320
    %1311 = vmatpush.msra.mxu0 %v318
    %1312 = vmatpush.msra.mxu0 %v316
    %1313 = vmatpush.msra.mxu0 %v314
    %1314 = vmatpush.msra.mxu0 %v312
    %1315 = vmatpush.msra.mxu0 %v310
    %1316 = vmatmul.f32.gmra.mxu0 %v1298
    %v1317 = vpop.f32.mrf.mxu0
    %v1318 = vadd.f32 0.0, %v1317
    %1319 = vdwg.mxu0
    %1320 = vmatpush.msra.mxu0 0.0
    %1321 = vmatpush.msra.mxu0 0.0
    %1322 = vmatpush.msra.mxu0 0.0
    %1323 = vmatpush.msra.mxu0 0.0
    %1324 = vmatpush.msra.mxu0 0.0
    %1325 = vmatpush.msra.mxu0 0.0
    %1326 = vmatpush.msra.mxu0 0.0
    %1327 = vmatpush.msra.mxu0 0.0
    %1328 = vmatpush.msra.mxu0 %v325
    %1329 = vmatpush.msra.mxu0 %v323
    %1330 = vmatpush.msra.mxu0 %v321
    %1331 = vmatpush.msra.mxu0 %v319
    %1332 = vmatpush.msra.mxu0 %v317
    %1333 = vmatpush.msra.mxu0 %v315
    %1334 = vmatpush.msra.mxu0 %v313
    %1335 = vmatpush.msra.mxu0 %v311
    %1336 = vmatmul.f32.gmra.mxu0 %v1298
    %v1337 = vpop.f32.mrf.mxu0
    %v1338 = vadd.f32 0.0, %v1337
    %1339 = vdwg.mxu0
    %v1341 = vsel %vm120, %v1296, 0
    %1343 = vmatpush.msra.mxu0 0.0
    %1344 = vmatpush.msra.mxu0 0.0
    %1345 = vmatpush.msra.mxu0 0.0
    %1346 = vmatpush.msra.mxu0 0.0
    %1347 = vmatpush.msra.mxu0 0.0
    %1348 = vmatpush.msra.mxu0 0.0
    %1349 = vmatpush.msra.mxu0 0.0
    %1350 = vmatpush.msra.mxu0 0.0
    %1351 = vmatpush.msra.mxu0 %v308
    %1352 = vmatpush.msra.mxu0 %v306
    %1353 = vmatpush.msra.mxu0 %v304
    %1354 = vmatpush.msra.mxu0 %v302
    %1355 = vmatpush.msra.mxu0 %v300
    %1356 = vmatpush.msra.mxu0 %v298
    %1357 = vmatpush.msra.mxu0 %v296
    %1358 = vmatpush.msra.mxu0 %v294
    %1359 = vmatmul.f32.gmra.mxu0 %v1341
    %v1360 = vpop.f32.mrf.mxu0
    %v1361 = vadd.f32 %v1318, %v1360
    %1362 = vdwg.mxu0
    %1363 = vmatpush.msra.mxu0 0.0
    %1364 = vmatpush.msra.mxu0 0.0
    %1365 = vmatpush.msra.mxu0 0.0
    %1366 = vmatpush.msra.mxu0 0.0
    %1367 = vmatpush.msra.mxu0 0.0
    %1368 = vmatpush.msra.mxu0 0.0
    %1369 = vmatpush.msra.mxu0 0.0
    %1370 = vmatpush.msra.mxu0 0.0
    %1371 = vmatpush.msra.mxu0 %v309
    %1372 = vmatpush.msra.mxu0 %v307
    %1373 = vmatpush.msra.mxu0 %v305
    %1374 = vmatpush.msra.mxu0 %v303
    %1375 = vmatpush.msra.mxu0 %v301
    %1376 = vmatpush.msra.mxu0 %v299
    %1377 = vmatpush.msra.mxu0 %v297
    %1378 = vmatpush.msra.mxu0 %v295
    %1379 = vmatmul.f32.gmra.mxu0 %v1341
    %v1380 = vpop.f32.mrf.mxu0
    %v1381 = vadd.f32 %v1338, %v1380
    %1382 = vdwg.mxu0
    %v1383 = vadd.f32 %v1361, %v175
    %v1384 = vadd.f32 %v1381, %v176
    %v1385 = vxor.u32 %v1383, 2147483648
    %v1386 = vxor.u32 %v1384, 2147483648
    %v1387 = vmul.f32 %v1385, 1.442695
    %v1388 = vpow.pop %v1387
    %v1389 = vmul.f32 %v1386, 1.442695
    %v1390 = vpow.pop %v1389
    %v1391 = vadd.f32 %v1388, 1.0
    %v1392 = vadd.f32 %v1390, 1.0
    %v1393 = vrcp.pop %v1391
    %v1394 = vmul.f32 %v1391, %v1393
    %v1395 = vsub.f32 1.0, %v1394
    %v1396 = vmul.f32 %v1393, %v1395
    %v1397 = vadd.f32 %v1393, %v1396
    %vm1398 = vweird.f32 %v1391
    %vm1399 = vweird.f32 %v1393
    %vm1400 = vmor %vm1398, %vm1399
    %v1401 = vsel %vm1400, %v1393, %v1397
    %v1402 = vand.u32 2147483647, %v1391
    %vm1403 = vcmp.eq.f32.partialorder %v1402, 8.507059e+37
    %v1404 = vand.u32 %v1391, 2147483648
    %v1405 = vor.u32 1.1754944e-38, %v1404
    %v1406 = vsel %vm1403, %v1405, %v1401
    %v1407 = vmul.f32 1.0, %v1406
    %v1408 = vrcp.pop %v1392
    %v1409 = vmul.f32 %v1392, %v1408
    %v1410 = vsub.f32 1.0, %v1409
    %v1411 = vmul.f32 %v1408, %v1410
    %v1412 = vadd.f32 %v1408, %v1411
    %vm1413 = vweird.f32 %v1392
    %vm1414 = vweird.f32 %v1408
    %vm1415 = vmor %vm1413, %vm1414
    %v1416 = vsel %vm1415, %v1408, %v1412
    %v1417 = vand.u32 2147483647, %v1392
    %vm1418 = vcmp.eq.f32.partialorder %v1417, 8.507059e+37
    %v1419 = vand.u32 %v1392, 2147483648
    %v1420 = vor.u32 1.1754944e-38, %v1419
    %v1421 = vsel %vm1418, %v1420, %v1416
    %v1422 = vmul.f32 1.0, %v1421
    %v1423 = vtanh.pop %v1384
    %v1424 = vmul.f32 %v1407, %v1194
    %1426 = vrot.lane.b32.xlu0 %v1423, 64
    %v1427 = vpop.permute.xlu0 %1426
    %v1429 = vmul.f32 %v1407, %v1427
    %1431 = vrot.lane.b32.xlu0 %v1429, 64
    %v1432 = vpop.permute.xlu0 %1431
    %v1434 = vadd.f32 %v1424, %v1432
    %v1435 = vtanh.pop %v1434
    %1437 = vrot.lane.b32.xlu0 %v1435, 64
    %v1438 = vpop.permute.xlu0 %1437
    %v1440 = vmul.f32 %v1422, %v1438
    %v1443 = vrot.slane %v148, 2
    %v1444 = vrot.slane %v171, 2
    %1447 = vmatpush.msra.mxu0 0.0
    %1448 = vmatpush.msra.mxu0 0.0
    %1449 = vmatpush.msra.mxu0 0.0
    %1450 = vmatpush.msra.mxu0 0.0
    %1451 = vmatpush.msra.mxu0 0.0
    %1452 = vmatpush.msra.mxu0 0.0
    %1453 = vmatpush.msra.mxu0 0.0
    %1454 = vmatpush.msra.mxu0 0.0
    %1455 = vmatpush.msra.mxu0 %v193
    %1456 = vmatpush.msra.mxu0 %v191
    %1457 = vmatpush.msra.mxu0 %v189
    %1458 = vmatpush.msra.mxu0 %v187
    %1459 = vmatpush.msra.mxu0 %v185
    %1460 = vmatpush.msra.mxu0 %v183
    %1461 = vmatpush.msra.mxu0 %v181
    %1462 = vmatpush.msra.mxu0 %v179
    %1463 = vmatmul.f32.gmra.mxu0 %v1341
    %v1464 = vpop.f32.mrf.mxu0
    %v1465 = vadd.f32 %v1443, %v1464
    %1466 = vdwg.mxu0
    %1467 = vmatpush.msra.mxu0 0.0
    %1468 = vmatpush.msra.mxu0 0.0
    %1469 = vmatpush.msra.mxu0 0.0
    %1470 = vmatpush.msra.mxu0 0.0
    %1471 = vmatpush.msra.mxu0 0.0
    %1472 = vmatpush.msra.mxu0 0.0
    %1473 = vmatpush.msra.mxu0 0.0
    %1474 = vmatpush.msra.mxu0 0.0
    %1475 = vmatpush.msra.mxu0 %v194
    %1476 = vmatpush.msra.mxu0 %v192
    %1477 = vmatpush.msra.mxu0 %v190
    %1478 = vmatpush.msra.mxu0 %v188
    %1479 = vmatpush.msra.mxu0 %v186
    %1480 = vmatpush.msra.mxu0 %v184
    %1481 = vmatpush.msra.mxu0 %v182
    %1482 = vmatpush.msra.mxu0 %v180
    %1483 = vmatmul.f32.gmra.mxu0 %v1341
    %v1484 = vpop.f32.mrf.mxu0
    %v1485 = vadd.f32 %v1444, %v1484
    %1486 = vdwg.mxu0
    %v1487 = vxor.u32 %v1465, 2147483648
    %v1488 = vxor.u32 %v1485, 2147483648
    %v1489 = vmul.f32 %v1487, 1.442695
    %v1490 = vpow.pop %v1489
    %v1491 = vmul.f32 %v1488, 1.442695
    %v1492 = vpow.pop %v1491
    %v1493 = vadd.f32 %v1490, 1.0
    %v1494 = vadd.f32 %v1492, 1.0
    %v1495 = vrcp.pop %v1493
    %v1496 = vmul.f32 %v1493, %v1495
    %v1497 = vsub.f32 1.0, %v1496
    %v1498 = vmul.f32 %v1495, %v1497
    %v1499 = vadd.f32 %v1495, %v1498
    %vm1500 = vweird.f32 %v1493
    %vm1501 = vweird.f32 %v1495
    %vm1502 = vmor %vm1500, %vm1501
    %v1503 = vsel %vm1502, %v1495, %v1499
    %v1504 = vand.u32 2147483647, %v1493
    %vm1505 = vcmp.eq.f32.partialorder %v1504, 8.507059e+37
    %v1506 = vand.u32 %v1493, 2147483648
    %v1507 = vor.u32 1.1754944e-38, %v1506
    %v1508 = vsel %vm1505, %v1507, %v1503
    %v1509 = vmul.f32 1.0, %v1508
    %v1510 = vrcp.pop %v1494
    %v1511 = vmul.f32 %v1494, %v1510
    %v1512 = vsub.f32 1.0, %v1511
    %v1513 = vmul.f32 %v1510, %v1512
    %v1514 = vadd.f32 %v1510, %v1513
    %vm1515 = vweird.f32 %v1494
    %vm1516 = vweird.f32 %v1510
    %vm1517 = vmor %vm1515, %vm1516
    %v1518 = vsel %vm1517, %v1510, %v1514
    %v1519 = vand.u32 2147483647, %v1494
    %vm1520 = vcmp.eq.f32.partialorder %v1519, 8.507059e+37
    %v1521 = vand.u32 %v1494, 2147483648
    %v1522 = vor.u32 1.1754944e-38, %v1521
    %v1523 = vsel %vm1520, %v1522, %v1518
    %v1524 = vmul.f32 1.0, %v1523
    %v1525 = vtanh.pop %v1485
    %v1526 = vmul.f32 %v1509, %v1290
    %1528 = vrot.lane.b32.xlu0 %v1525, 64
    %v1529 = vpop.permute.xlu0 %1528
    %v1531 = vmul.f32 %v1509, %v1529
    %1533 = vrot.lane.b32.xlu0 %v1531, 64
    %v1534 = vpop.permute.xlu0 %1533
    %v1536 = vadd.f32 %v1526, %v1534
    %v1537 = vtanh.pop %v1536
    %1539 = vrot.lane.b32.xlu0 %v1537, 64
    %v1540 = vpop.permute.xlu0 %1539
    %v1542 = vmul.f32 %v1524, %v1540
    %v1544 = vsel %vm120, %v1440, 0
    %1546 = vmatpush.msra.mxu0 0.0
    %1547 = vmatpush.msra.mxu0 0.0
    %1548 = vmatpush.msra.mxu0 0.0
    %1549 = vmatpush.msra.mxu0 0.0
    %1550 = vmatpush.msra.mxu0 0.0
    %1551 = vmatpush.msra.mxu0 0.0
    %1552 = vmatpush.msra.mxu0 0.0
    %1553 = vmatpush.msra.mxu0 0.0
    %1554 = vmatpush.msra.mxu0 %v324
    %1555 = vmatpush.msra.mxu0 %v322
    %1556 = vmatpush.msra.mxu0 %v320
    %1557 = vmatpush.msra.mxu0 %v318
    %1558 = vmatpush.msra.mxu0 %v316
    %1559 = vmatpush.msra.mxu0 %v314
    %1560 = vmatpush.msra.mxu0 %v312
    %1561 = vmatpush.msra.mxu0 %v310
    %1562 = vmatmul.f32.gmra.mxu0 %v1544
    %v1563 = vpop.f32.mrf.mxu0
    %v1564 = vadd.f32 0.0, %v1563
    %1565 = vdwg.mxu0
    %1566 = vmatpush.msra.mxu0 0.0
    %1567 = vmatpush.msra.mxu0 0.0
    %1568 = vmatpush.msra.mxu0 0.0
    %1569 = vmatpush.msra.mxu0 0.0
    %1570 = vmatpush.msra.mxu0 0.0
    %1571 = vmatpush.msra.mxu0 0.0
    %1572 = vmatpush.msra.mxu0 0.0
    %1573 = vmatpush.msra.mxu0 0.0
    %1574 = vmatpush.msra.mxu0 %v325
    %1575 = vmatpush.msra.mxu0 %v323
    %1576 = vmatpush.msra.mxu0 %v321
    %1577 = vmatpush.msra.mxu0 %v319
    %1578 = vmatpush.msra.mxu0 %v317
    %1579 = vmatpush.msra.mxu0 %v315
    %1580 = vmatpush.msra.mxu0 %v313
    %1581 = vmatpush.msra.mxu0 %v311
    %1582 = vmatmul.f32.gmra.mxu0 %v1544
    %v1583 = vpop.f32.mrf.mxu0
    %v1584 = vadd.f32 0.0, %v1583
    %1585 = vdwg.mxu0
    %v1587 = vsel %vm120, %v1542, 0
    %1589 = vmatpush.msra.mxu0 0.0
    %1590 = vmatpush.msra.mxu0 0.0
    %1591 = vmatpush.msra.mxu0 0.0
    %1592 = vmatpush.msra.mxu0 0.0
    %1593 = vmatpush.msra.mxu0 0.0
    %1594 = vmatpush.msra.mxu0 0.0
    %1595 = vmatpush.msra.mxu0 0.0
    %1596 = vmatpush.msra.mxu0 0.0
    %1597 = vmatpush.msra.mxu0 %v308
    %1598 = vmatpush.msra.mxu0 %v306
    %1599 = vmatpush.msra.mxu0 %v304
    %1600 = vmatpush.msra.mxu0 %v302
    %1601 = vmatpush.msra.mxu0 %v300
    %1602 = vmatpush.msra.mxu0 %v298
    %1603 = vmatpush.msra.mxu0 %v296
    %1604 = vmatpush.msra.mxu0 %v294
    %1605 = vmatmul.f32.gmra.mxu0 %v1587
    %v1606 = vpop.f32.mrf.mxu0
    %v1607 = vadd.f32 %v1564, %v1606
    %1608 = vdwg.mxu0
    %1609 = vmatpush.msra.mxu0 0.0
    %1610 = vmatpush.msra.mxu0 0.0
    %1611 = vmatpush.msra.mxu0 0.0
    %1612 = vmatpush.msra.mxu0 0.0
    %1613 = vmatpush.msra.mxu0 0.0
    %1614 = vmatpush.msra.mxu0 0.0
    %1615 = vmatpush.msra.mxu0 0.0
    %1616 = vmatpush.msra.mxu0 0.0
    %1617 = vmatpush.msra.mxu0 %v309
    %1618 = vmatpush.msra.mxu0 %v307
    %1619 = vmatpush.msra.mxu0 %v305
    %1620 = vmatpush.msra.mxu0 %v303
    %1621 = vmatpush.msra.mxu0 %v301
    %1622 = vmatpush.msra.mxu0 %v299
    %1623 = vmatpush.msra.mxu0 %v297
    %1624 = vmatpush.msra.mxu0 %v295
    %1625 = vmatmul.f32.gmra.mxu0 %v1587
    %v1626 = vpop.f32.mrf.mxu0
    %v1627 = vadd.f32 %v1584, %v1626
    %1628 = vdwg.mxu0
    %v1629 = vadd.f32 %v1607, %v175
    %v1630 = vadd.f32 %v1627, %v176
    %v1631 = vxor.u32 %v1629, 2147483648
    %v1632 = vxor.u32 %v1630, 2147483648
    %v1633 = vmul.f32 %v1631, 1.442695
    %v1634 = vpow.pop %v1633
    %v1635 = vmul.f32 %v1632, 1.442695
    %v1636 = vpow.pop %v1635
    %v1637 = vadd.f32 %v1634, 1.0
    %v1638 = vadd.f32 %v1636, 1.0
    %v1639 = vrcp.pop %v1637
    %v1640 = vmul.f32 %v1637, %v1639
    %v1641 = vsub.f32 1.0, %v1640
    %v1642 = vmul.f32 %v1639, %v1641
    %v1643 = vadd.f32 %v1639, %v1642
    %vm1644 = vweird.f32 %v1637
    %vm1645 = vweird.f32 %v1639
    %vm1646 = vmor %vm1644, %vm1645
    %v1647 = vsel %vm1646, %v1639, %v1643
    %v1648 = vand.u32 2147483647, %v1637
    %vm1649 = vcmp.eq.f32.partialorder %v1648, 8.507059e+37
    %v1650 = vand.u32 %v1637, 2147483648
    %v1651 = vor.u32 1.1754944e-38, %v1650
    %v1652 = vsel %vm1649, %v1651, %v1647
    %v1653 = vmul.f32 1.0, %v1652
    %v1654 = vrcp.pop %v1638
    %v1655 = vmul.f32 %v1638, %v1654
    %v1656 = vsub.f32 1.0, %v1655
    %v1657 = vmul.f32 %v1654, %v1656
    %v1658 = vadd.f32 %v1654, %v1657
    %vm1659 = vweird.f32 %v1638
    %vm1660 = vweird.f32 %v1654
    %vm1661 = vmor %vm1659, %vm1660
    %v1662 = vsel %vm1661, %v1654, %v1658
    %v1663 = vand.u32 2147483647, %v1638
    %vm1664 = vcmp.eq.f32.partialorder %v1663, 8.507059e+37
    %v1665 = vand.u32 %v1638, 2147483648
    %v1666 = vor.u32 1.1754944e-38, %v1665
    %v1667 = vsel %vm1664, %v1666, %v1662
    %v1668 = vmul.f32 1.0, %v1667
    %v1669 = vtanh.pop %v1630
    %v1670 = vmul.f32 %v1653, %v1434
    %1672 = vrot.lane.b32.xlu0 %v1669, 64
    %v1673 = vpop.permute.xlu0 %1672
    %v1675 = vmul.f32 %v1653, %v1673
    %1677 = vrot.lane.b32.xlu0 %v1675, 64
    %v1678 = vpop.permute.xlu0 %1677
    %v1680 = vadd.f32 %v1670, %v1678
    %v1681 = vtanh.pop %v1680
    %1683 = vrot.lane.b32.xlu0 %v1681, 64
    %v1684 = vpop.permute.xlu0 %1683
    %v1686 = vmul.f32 %v1668, %v1684
    %v1687 = vrot.slane %v148, 4
    %v1688 = vrot.slane %v171, 4
    %1691 = vmatpush.msra.mxu0 0.0
    %1692 = vmatpush.msra.mxu0 0.0
    %1693 = vmatpush.msra.mxu0 0.0
    %1694 = vmatpush.msra.mxu0 0.0
    %1695 = vmatpush.msra.mxu0 0.0
    %1696 = vmatpush.msra.mxu0 0.0
    %1697 = vmatpush.msra.mxu0 0.0
    %1698 = vmatpush.msra.mxu0 0.0
    %1699 = vmatpush.msra.mxu0 %v193
    %1700 = vmatpush.msra.mxu0 %v191
    %1701 = vmatpush.msra.mxu0 %v189
    %1702 = vmatpush.msra.mxu0 %v187
    %1703 = vmatpush.msra.mxu0 %v185
    %1704 = vmatpush.msra.mxu0 %v183
    %1705 = vmatpush.msra.mxu0 %v181
    %1706 = vmatpush.msra.mxu0 %v179
    %1707 = vmatmul.f32.gmra.mxu0 %v1587
    %v1708 = vpop.f32.mrf.mxu0
    %v1709 = vadd.f32 %v1687, %v1708
    %1710 = vdwg.mxu0
    %1711 = vmatpush.msra.mxu0 0.0
    %1712 = vmatpush.msra.mxu0 0.0
    %1713 = vmatpush.msra.mxu0 0.0
    %1714 = vmatpush.msra.mxu0 0.0
    %1715 = vmatpush.msra.mxu0 0.0
    %1716 = vmatpush.msra.mxu0 0.0
    %1717 = vmatpush.msra.mxu0 0.0
    %1718 = vmatpush.msra.mxu0 0.0
    %1719 = vmatpush.msra.mxu0 %v194
    %1720 = vmatpush.msra.mxu0 %v192
    %1721 = vmatpush.msra.mxu0 %v190
    %1722 = vmatpush.msra.mxu0 %v188
    %1723 = vmatpush.msra.mxu0 %v186
    %1724 = vmatpush.msra.mxu0 %v184
    %1725 = vmatpush.msra.mxu0 %v182
    %1726 = vmatpush.msra.mxu0 %v180
    %1727 = vmatmul.f32.gmra.mxu0 %v1587
    %v1728 = vpop.f32.mrf.mxu0
    %v1729 = vadd.f32 %v1688, %v1728
    %1730 = vdwg.mxu0
    %v1731 = vxor.u32 %v1709, 2147483648
    %v1732 = vxor.u32 %v1729, 2147483648
    %v1733 = vmul.f32 %v1731, 1.442695
    %v1734 = vpow.pop %v1733
    %v1735 = vmul.f32 %v1732, 1.442695
    %v1736 = vpow.pop %v1735
    %v1737 = vadd.f32 %v1734, 1.0
    %v1738 = vadd.f32 %v1736, 1.0
    %v1739 = vrcp.pop %v1737
    %v1740 = vmul.f32 %v1737, %v1739
    %v1741 = vsub.f32 1.0, %v1740
    %v1742 = vmul.f32 %v1739, %v1741
    %v1743 = vadd.f32 %v1739, %v1742
    %vm1744 = vweird.f32 %v1737
    %vm1745 = vweird.f32 %v1739
    %vm1746 = vmor %vm1744, %vm1745
    %v1747 = vsel %vm1746, %v1739, %v1743
    %v1748 = vand.u32 2147483647, %v1737
    %vm1749 = vcmp.eq.f32.partialorder %v1748, 8.507059e+37
    %v1750 = vand.u32 %v1737, 2147483648
    %v1751 = vor.u32 1.1754944e-38, %v1750
    %v1752 = vsel %vm1749, %v1751, %v1747
    %v1753 = vmul.f32 1.0, %v1752
    %v1754 = vrcp.pop %v1738
    %v1755 = vmul.f32 %v1738, %v1754
    %v1756 = vsub.f32 1.0, %v1755
    %v1757 = vmul.f32 %v1754, %v1756
    %v1758 = vadd.f32 %v1754, %v1757
    %vm1759 = vweird.f32 %v1738
    %vm1760 = vweird.f32 %v1754
    %vm1761 = vmor %vm1759, %vm1760
    %v1762 = vsel %vm1761, %v1754, %v1758
    %v1763 = vand.u32 2147483647, %v1738
    %vm1764 = vcmp.eq.f32.partialorder %v1763, 8.507059e+37
    %v1765 = vand.u32 %v1738, 2147483648
    %v1766 = vor.u32 1.1754944e-38, %v1765
    %v1767 = vsel %vm1764, %v1766, %v1762
    %v1768 = vmul.f32 1.0, %v1767
    %v1769 = vtanh.pop %v1729
    %v1770 = vmul.f32 %v1753, %v1536
    %1772 = vrot.lane.b32.xlu0 %v1769, 64
    %v1773 = vpop.permute.xlu0 %1772
    %v1775 = vmul.f32 %v1753, %v1773
    %1777 = vrot.lane.b32.xlu0 %v1775, 64
    %v1778 = vpop.permute.xlu0 %1777
    %v1780 = vadd.f32 %v1770, %v1778
    %v1781 = vtanh.pop %v1780
    %1783 = vrot.lane.b32.xlu0 %v1781, 64
    %v1784 = vpop.permute.xlu0 %1783
    %v1786 = vmul.f32 %v1768, %v1784
    %v1788 = vsel %vm120, %v1686, 0
    %1790 = vmatpush.msra.mxu0 0.0
    %1791 = vmatpush.msra.mxu0 0.0
    %1792 = vmatpush.msra.mxu0 0.0
    %1793 = vmatpush.msra.mxu0 0.0
    %1794 = vmatpush.msra.mxu0 0.0
    %1795 = vmatpush.msra.mxu0 0.0
    %1796 = vmatpush.msra.mxu0 0.0
    %1797 = vmatpush.msra.mxu0 0.0
    %1798 = vmatpush.msra.mxu0 %v324
    %1799 = vmatpush.msra.mxu0 %v322
    %1800 = vmatpush.msra.mxu0 %v320
    %1801 = vmatpush.msra.mxu0 %v318
    %1802 = vmatpush.msra.mxu0 %v316
    %1803 = vmatpush.msra.mxu0 %v314
    %1804 = vmatpush.msra.mxu0 %v312
    %1805 = vmatpush.msra.mxu0 %v310
    %1806 = vmatmul.f32.gmra.mxu0 %v1788
    %v1807 = vpop.f32.mrf.mxu0
    %v1808 = vadd.f32 0.0, %v1807
    %1809 = vdwg.mxu0
    %1810 = vmatpush.msra.mxu0 0.0
    %1811 = vmatpush.msra.mxu0 0.0
    %1812 = vmatpush.msra.mxu0 0.0
    %1813 = vmatpush.msra.mxu0 0.0
    %1814 = vmatpush.msra.mxu0 0.0
    %1815 = vmatpush.msra.mxu0 0.0
    %1816 = vmatpush.msra.mxu0 0.0
    %1817 = vmatpush.msra.mxu0 0.0
    %1818 = vmatpush.msra.mxu0 %v325
    %1819 = vmatpush.msra.mxu0 %v323
    %1820 = vmatpush.msra.mxu0 %v321
    %1821 = vmatpush.msra.mxu0 %v319
    %1822 = vmatpush.msra.mxu0 %v317
    %1823 = vmatpush.msra.mxu0 %v315
    %1824 = vmatpush.msra.mxu0 %v313
    %1825 = vmatpush.msra.mxu0 %v311
    %1826 = vmatmul.f32.gmra.mxu0 %v1788
    %v1827 = vpop.f32.mrf.mxu0
    %v1828 = vadd.f32 0.0, %v1827
    %1829 = vdwg.mxu0
    %v1831 = vsel %vm120, %v1786, 0
    %1833 = vmatpush.msra.mxu0 0.0
    %1834 = vmatpush.msra.mxu0 0.0
    %1835 = vmatpush.msra.mxu0 0.0
    %1836 = vmatpush.msra.mxu0 0.0
    %1837 = vmatpush.msra.mxu0 0.0
    %1838 = vmatpush.msra.mxu0 0.0
    %1839 = vmatpush.msra.mxu0 0.0
    %1840 = vmatpush.msra.mxu0 0.0
    %1841 = vmatpush.msra.mxu0 %v308
    %1842 = vmatpush.msra.mxu0 %v306
    %1843 = vmatpush.msra.mxu0 %v304
    %1844 = vmatpush.msra.mxu0 %v302
    %1845 = vmatpush.msra.mxu0 %v300
    %1846 = vmatpush.msra.mxu0 %v298
    %1847 = vmatpush.msra.mxu0 %v296
    %1848 = vmatpush.msra.mxu0 %v294
    %1849 = vmatmul.f32.gmra.mxu0 %v1831
    %v1850 = vpop.f32.mrf.mxu0
    %v1851 = vadd.f32 %v1808, %v1850
    %1852 = vdwg.mxu0
    %1853 = vmatpush.msra.mxu0 0.0
    %1854 = vmatpush.msra.mxu0 0.0
    %1855 = vmatpush.msra.mxu0 0.0
    %1856 = vmatpush.msra.mxu0 0.0
    %1857 = vmatpush.msra.mxu0 0.0
    %1858 = vmatpush.msra.mxu0 0.0
    %1859 = vmatpush.msra.mxu0 0.0
    %1860 = vmatpush.msra.mxu0 0.0
    %1861 = vmatpush.msra.mxu0 %v309
    %1862 = vmatpush.msra.mxu0 %v307
    %1863 = vmatpush.msra.mxu0 %v305
    %1864 = vmatpush.msra.mxu0 %v303
    %1865 = vmatpush.msra.mxu0 %v301
    %1866 = vmatpush.msra.mxu0 %v299
    %1867 = vmatpush.msra.mxu0 %v297
    %1868 = vmatpush.msra.mxu0 %v295
    %1869 = vmatmul.f32.gmra.mxu0 %v1831
    %v1870 = vpop.f32.mrf.mxu0
    %v1871 = vadd.f32 %v1828, %v1870
    %1872 = vdwg.mxu0
    %v1873 = vadd.f32 %v1851, %v175
    %v1874 = vadd.f32 %v1871, %v176
    %v1875 = vxor.u32 %v1873, 2147483648
    %v1876 = vxor.u32 %v1874, 2147483648
    %v1877 = vmul.f32 %v1875, 1.442695
    %v1878 = vpow.pop %v1877
    %v1879 = vmul.f32 %v1876, 1.442695
    %v1880 = vpow.pop %v1879
    %v1881 = vadd.f32 %v1878, 1.0
    %v1882 = vadd.f32 %v1880, 1.0
    %v1883 = vrcp.pop %v1881
    %v1884 = vmul.f32 %v1881, %v1883
    %v1885 = vsub.f32 1.0, %v1884
    %v1886 = vmul.f32 %v1883, %v1885
    %v1887 = vadd.f32 %v1883, %v1886
    %vm1888 = vweird.f32 %v1881
    %vm1889 = vweird.f32 %v1883
    %vm1890 = vmor %vm1888, %vm1889
    %v1891 = vsel %vm1890, %v1883, %v1887
    %v1892 = vand.u32 2147483647, %v1881
    %vm1893 = vcmp.eq.f32.partialorder %v1892, 8.507059e+37
    %v1894 = vand.u32 %v1881, 2147483648
    %v1895 = vor.u32 1.1754944e-38, %v1894
    %v1896 = vsel %vm1893, %v1895, %v1891
    %v1897 = vmul.f32 1.0, %v1896
    %v1898 = vrcp.pop %v1882
    %v1899 = vmul.f32 %v1882, %v1898
    %v1900 = vsub.f32 1.0, %v1899
    %v1901 = vmul.f32 %v1898, %v1900
    %v1902 = vadd.f32 %v1898, %v1901
    %vm1903 = vweird.f32 %v1882
    %vm1904 = vweird.f32 %v1898
    %vm1905 = vmor %vm1903, %vm1904
    %v1906 = vsel %vm1905, %v1898, %v1902
    %v1907 = vand.u32 2147483647, %v1882
    %vm1908 = vcmp.eq.f32.partialorder %v1907, 8.507059e+37
    %v1909 = vand.u32 %v1882, 2147483648
    %v1910 = vor.u32 1.1754944e-38, %v1909
    %v1911 = vsel %vm1908, %v1910, %v1906
    %v1912 = vmul.f32 1.0, %v1911
    %v1913 = vtanh.pop %v1874
    %v1914 = vmul.f32 %v1897, %v1680
    %1916 = vrot.lane.b32.xlu0 %v1913, 64
    %v1917 = vpop.permute.xlu0 %1916
    %v1919 = vmul.f32 %v1897, %v1917
    %1921 = vrot.lane.b32.xlu0 %v1919, 64
    %v1922 = vpop.permute.xlu0 %1921
    %v1924 = vadd.f32 %v1914, %v1922
    %v1925 = vtanh.pop %v1924
    %1927 = vrot.lane.b32.xlu0 %v1925, 64
    %v1928 = vpop.permute.xlu0 %1927
    %v1930 = vmul.f32 %v1912, %v1928
    %v1931 = vrot.slane %v148, 6
    %v1932 = vrot.slane %v171, 6
    %1935 = vmatpush.msra.mxu0 0.0
    %1936 = vmatpush.msra.mxu0 0.0
    %1937 = vmatpush.msra.mxu0 0.0
    %1938 = vmatpush.msra.mxu0 0.0
    %1939 = vmatpush.msra.mxu0 0.0
    %1940 = vmatpush.msra.mxu0 0.0
    %1941 = vmatpush.msra.mxu0 0.0
    %1942 = vmatpush.msra.mxu0 0.0
    %1943 = vmatpush.msra.mxu0 %v193
    %1944 = vmatpush.msra.mxu0 %v191
    %1945 = vmatpush.msra.mxu0 %v189
    %1946 = vmatpush.msra.mxu0 %v187
    %1947 = vmatpush.msra.mxu0 %v185
    %1948 = vmatpush.msra.mxu0 %v183
    %1949 = vmatpush.msra.mxu0 %v181
    %1950 = vmatpush.msra.mxu0 %v179
    %1951 = vmatmul.f32.gmra.mxu0 %v1831
    %v1952 = vpop.f32.mrf.mxu0
    %v1953 = vadd.f32 %v1931, %v1952
    %1954 = vdwg.mxu0
    %1955 = vmatpush.msra.mxu0 0.0
    %1956 = vmatpush.msra.mxu0 0.0
    %1957 = vmatpush.msra.mxu0 0.0
    %1958 = vmatpush.msra.mxu0 0.0
    %1959 = vmatpush.msra.mxu0 0.0
    %1960 = vmatpush.msra.mxu0 0.0
    %1961 = vmatpush.msra.mxu0 0.0
    %1962 = vmatpush.msra.mxu0 0.0
    %1963 = vmatpush.msra.mxu0 %v194
    %1964 = vmatpush.msra.mxu0 %v192
    %1965 = vmatpush.msra.mxu0 %v190
    %1966 = vmatpush.msra.mxu0 %v188
    %1967 = vmatpush.msra.mxu0 %v186
    %1968 = vmatpush.msra.mxu0 %v184
    %1969 = vmatpush.msra.mxu0 %v182
    %1970 = vmatpush.msra.mxu0 %v180
    %1971 = vmatmul.f32.gmra.mxu0 %v1831
    %v1972 = vpop.f32.mrf.mxu0
    %v1973 = vadd.f32 %v1932, %v1972
    %1974 = vdwg.mxu0
    %v1975 = vxor.u32 %v1953, 2147483648
    %v1976 = vxor.u32 %v1973, 2147483648
    %v1977 = vmul.f32 %v1975, 1.442695
    %v1978 = vpow.pop %v1977
    %v1979 = vmul.f32 %v1976, 1.442695
    %v1980 = vpow.pop %v1979
    %v1981 = vadd.f32 %v1978, 1.0
    %v1982 = vadd.f32 %v1980, 1.0
    %v1983 = vrcp.pop %v1981
    %v1984 = vmul.f32 %v1981, %v1983
    %v1985 = vsub.f32 1.0, %v1984
    %v1986 = vmul.f32 %v1983, %v1985
    %v1987 = vadd.f32 %v1983, %v1986
    %vm1988 = vweird.f32 %v1981
    %vm1989 = vweird.f32 %v1983
    %vm1990 = vmor %vm1988, %vm1989
    %v1991 = vsel %vm1990, %v1983, %v1987
    %v1992 = vand.u32 2147483647, %v1981
    %vm1993 = vcmp.eq.f32.partialorder %v1992, 8.507059e+37
    %v1994 = vand.u32 %v1981, 2147483648
    %v1995 = vor.u32 1.1754944e-38, %v1994
    %v1996 = vsel %vm1993, %v1995, %v1991
    %v1997 = vmul.f32 1.0, %v1996
    %v1998 = vrcp.pop %v1982
    %v1999 = vmul.f32 %v1982, %v1998
    %v2000 = vsub.f32 1.0, %v1999
    %v2001 = vmul.f32 %v1998, %v2000
    %v2002 = vadd.f32 %v1998, %v2001
    %vm2003 = vweird.f32 %v1982
    %vm2004 = vweird.f32 %v1998
    %vm2005 = vmor %vm2003, %vm2004
    %v2006 = vsel %vm2005, %v1998, %v2002
    %v2007 = vand.u32 2147483647, %v1982
    %vm2008 = vcmp.eq.f32.partialorder %v2007, 8.507059e+37
    %v2009 = vand.u32 %v1982, 2147483648
    %v2010 = vor.u32 1.1754944e-38, %v2009
    %v2011 = vsel %vm2008, %v2010, %v2006
    %v2012 = vmul.f32 1.0, %v2011
    %v2013 = vtanh.pop %v1973
    %v2014 = vmul.f32 %v1997, %v1780
    %2016 = vrot.lane.b32.xlu0 %v2013, 64
    %v2017 = vpop.permute.xlu0 %2016
    %v2019 = vmul.f32 %v1997, %v2017
    %2021 = vrot.lane.b32.xlu0 %v2019, 64
    %v2022 = vpop.permute.xlu0 %2021
    %v2024 = vadd.f32 %v2014, %v2022
    %v2025 = vtanh.pop %v2024
    %2027 = vrot.lane.b32.xlu0 %v2025, 64
    %v2028 = vpop.permute.xlu0 %2027
    %v2030 = vmul.f32 %v2012, %v2028
    %v2032 = vsel %vm120, %v1930, 0
    %2034 = vmatpush.msra.mxu0 0.0
    %2035 = vmatpush.msra.mxu0 0.0
    %2036 = vmatpush.msra.mxu0 0.0
    %2037 = vmatpush.msra.mxu0 0.0
    %2038 = vmatpush.msra.mxu0 0.0
    %2039 = vmatpush.msra.mxu0 0.0
    %2040 = vmatpush.msra.mxu0 0.0
    %2041 = vmatpush.msra.mxu0 0.0
    %2042 = vmatpush.msra.mxu0 %v324
    %2043 = vmatpush.msra.mxu0 %v322
    %2044 = vmatpush.msra.mxu0 %v320
    %2045 = vmatpush.msra.mxu0 %v318
    %2046 = vmatpush.msra.mxu0 %v316
    %2047 = vmatpush.msra.mxu0 %v314
    %2048 = vmatpush.msra.mxu0 %v312
    %2049 = vmatpush.msra.mxu0 %v310
    %2050 = vmatmul.f32.gmra.mxu0 %v2032
    %v2051 = vpop.f32.mrf.mxu0
    %v2052 = vadd.f32 0.0, %v2051
    %2053 = vdwg.mxu0
    %2054 = vmatpush.msra.mxu0 0.0
    %2055 = vmatpush.msra.mxu0 0.0
    %2056 = vmatpush.msra.mxu0 0.0
    %2057 = vmatpush.msra.mxu0 0.0
    %2058 = vmatpush.msra.mxu0 0.0
    %2059 = vmatpush.msra.mxu0 0.0
    %2060 = vmatpush.msra.mxu0 0.0
    %2061 = vmatpush.msra.mxu0 0.0
    %2062 = vmatpush.msra.mxu0 %v325
    %2063 = vmatpush.msra.mxu0 %v323
    %2064 = vmatpush.msra.mxu0 %v321
    %2065 = vmatpush.msra.mxu0 %v319
    %2066 = vmatpush.msra.mxu0 %v317
    %2067 = vmatpush.msra.mxu0 %v315
    %2068 = vmatpush.msra.mxu0 %v313
    %2069 = vmatpush.msra.mxu0 %v311
    %2070 = vmatmul.f32.gmra.mxu0 %v2032
    %v2071 = vpop.f32.mrf.mxu0
    %v2072 = vadd.f32 0.0, %v2071
    %2073 = vdwg.mxu0
    %v2075 = vsel %vm120, %v2030, 0
    %2077 = vmatpush.msra.mxu0 0.0
    %2078 = vmatpush.msra.mxu0 0.0
    %2079 = vmatpush.msra.mxu0 0.0
    %2080 = vmatpush.msra.mxu0 0.0
    %2081 = vmatpush.msra.mxu0 0.0
    %2082 = vmatpush.msra.mxu0 0.0
    %2083 = vmatpush.msra.mxu0 0.0
    %2084 = vmatpush.msra.mxu0 0.0
    %2085 = vmatpush.msra.mxu0 %v308
    %2086 = vmatpush.msra.mxu0 %v306
    %2087 = vmatpush.msra.mxu0 %v304
    %2088 = vmatpush.msra.mxu0 %v302
    %2089 = vmatpush.msra.mxu0 %v300
    %2090 = vmatpush.msra.mxu0 %v298
    %2091 = vmatpush.msra.mxu0 %v296
    %2092 = vmatpush.msra.mxu0 %v294
    %2093 = vmatmul.f32.gmra.mxu0 %v2075
    %v2094 = vpop.f32.mrf.mxu0
    %v2095 = vadd.f32 %v2052, %v2094
    %2096 = vdwg.mxu0
    %2097 = vmatpush.msra.mxu0 0.0
    %2098 = vmatpush.msra.mxu0 0.0
    %2099 = vmatpush.msra.mxu0 0.0
    %2100 = vmatpush.msra.mxu0 0.0
    %2101 = vmatpush.msra.mxu0 0.0
    %2102 = vmatpush.msra.mxu0 0.0
    %2103 = vmatpush.msra.mxu0 0.0
    %2104 = vmatpush.msra.mxu0 0.0
    %2105 = vmatpush.msra.mxu0 %v309
    %2106 = vmatpush.msra.mxu0 %v307
    %2107 = vmatpush.msra.mxu0 %v305
    %2108 = vmatpush.msra.mxu0 %v303
    %2109 = vmatpush.msra.mxu0 %v301
    %2110 = vmatpush.msra.mxu0 %v299
    %2111 = vmatpush.msra.mxu0 %v297
    %2112 = vmatpush.msra.mxu0 %v295
    %2113 = vmatmul.f32.gmra.mxu0 %v2075
    %v2114 = vpop.f32.mrf.mxu0
    %v2115 = vadd.f32 %v2072, %v2114
    %2116 = vdwg.mxu0
    %v2117 = vadd.f32 %v2095, %v175
    %v2118 = vadd.f32 %v2115, %v176
    %v2119 = vxor.u32 %v2117, 2147483648
    %v2120 = vxor.u32 %v2118, 2147483648
    %v2121 = vmul.f32 %v2119, 1.442695
    %v2122 = vpow.pop %v2121
    %v2123 = vmul.f32 %v2120, 1.442695
    %v2124 = vpow.pop %v2123
    %v2125 = vadd.f32 %v2122, 1.0
    %v2126 = vadd.f32 %v2124, 1.0
    %v2127 = vrcp.pop %v2125
    %v2128 = vmul.f32 %v2125, %v2127
    %v2129 = vsub.f32 1.0, %v2128
    %v2130 = vmul.f32 %v2127, %v2129
    %v2131 = vadd.f32 %v2127, %v2130
    %vm2132 = vweird.f32 %v2125
    %vm2133 = vweird.f32 %v2127
    %vm2134 = vmor %vm2132, %vm2133
    %v2135 = vsel %vm2134, %v2127, %v2131
    %v2136 = vand.u32 2147483647, %v2125
    %vm2137 = vcmp.eq.f32.partialorder %v2136, 8.507059e+37
    %v2138 = vand.u32 %v2125, 2147483648
    %v2139 = vor.u32 1.1754944e-38, %v2138
    %v2140 = vsel %vm2137, %v2139, %v2135
    %v2141 = vmul.f32 1.0, %v2140
    %v2142 = vrcp.pop %v2126
    %v2143 = vmul.f32 %v2126, %v2142
    %v2144 = vsub.f32 1.0, %v2143
    %v2145 = vmul.f32 %v2142, %v2144
    %v2146 = vadd.f32 %v2142, %v2145
    %vm2147 = vweird.f32 %v2126
    %vm2148 = vweird.f32 %v2142
    %vm2149 = vmor %vm2147, %vm2148
    %v2150 = vsel %vm2149, %v2142, %v2146
    %v2151 = vand.u32 2147483647, %v2126
    %vm2152 = vcmp.eq.f32.partialorder %v2151, 8.507059e+37
    %v2153 = vand.u32 %v2126, 2147483648
    %v2154 = vor.u32 1.1754944e-38, %v2153
    %v2155 = vsel %vm2152, %v2154, %v2150
    %v2156 = vmul.f32 1.0, %v2155
    %v2157 = vtanh.pop %v2118
    %v2158 = vmul.f32 %v2141, %v1924
    %2160 = vrot.lane.b32.xlu0 %v2157, 64
    %v2161 = vpop.permute.xlu0 %2160
    %v2163 = vmul.f32 %v2141, %v2161
    %2165 = vrot.lane.b32.xlu0 %v2163, 64
    %v2166 = vpop.permute.xlu0 %2165
    %v2168 = vadd.f32 %v2158, %v2166
    %v2169 = vtanh.pop %v2168
    %2171 = vrot.lane.b32.xlu0 %v2169, 64
    %v2172 = vpop.permute.xlu0 %2171
    %v2174 = vmul.f32 %v2156, %v2172
    %v2175 = vld [vmem:[%s7] sm:$0xff]
    %v2176 = vld [vmem:[%s7 + $0x8] sm:$0xff]
    %v2177 = vld [vmem:[%s7 + $0x10] sm:$0xff]
    %v2178 = vld [vmem:[%s7 + $0x18] sm:$0xff]
    %v2179 = vld [vmem:[%s7 + $0x20] sm:$0xff]
    %v2180 = vld [vmem:[%s7 + $0x28] sm:$0xff]
    %v2181 = vld [vmem:[%s7 + $0x30] sm:$0xff]
    %v2182 = vld [vmem:[%s7 + $0x38] sm:$0xff]
    %v2183 = vld [vmem:[%s8] sm:$0x1]
    %v2185 = vperm.slane %v2183, 0
    %v2188 = vsel %vm120, %v2174, 0
    %2190 = vmatpush.msra.mxu0 0.0
    %2191 = vmatpush.msra.mxu0 0.0
    %2192 = vmatpush.msra.mxu0 0.0
    %2193 = vmatpush.msra.mxu0 0.0
    %2194 = vmatpush.msra.mxu0 0.0
    %2195 = vmatpush.msra.mxu0 0.0
    %2196 = vmatpush.msra.mxu0 0.0
    %2197 = vmatpush.msra.mxu0 0.0
    %2198 = vmatpush.msra.mxu0 %v2182
    %2199 = vmatpush.msra.mxu0 %v2181
    %2200 = vmatpush.msra.mxu0 %v2180
    %2201 = vmatpush.msra.mxu0 %v2179
    %2202 = vmatpush.msra.mxu0 %v2178
    %2203 = vmatpush.msra.mxu0 %v2177
    %2204 = vmatpush.msra.mxu0 %v2176
    %2205 = vmatpush.msra.mxu0 %v2175
    %2206 = vmatmul.f32.gmra.mxu0 %v2188
    %v2207 = vpop.f32.mrf.mxu0
    %v2208 = vadd.f32 %v2185, %v2207
    %2209 = vdwg.mxu0
    %vm2210 = vcmask 107520
    %2211 = vst.msk [vmem:[#allocation10] sm:$0x3] %vm2210, %v2208
    // Predicated region
    $region54: #{multi_output_lstm.1} parent=1 // pred_check
      _
    $region55: #{multi_output_lstm.1} parent=1 // pred_check_branch
      %2213 = sbr.rel (0) target = $region57
    $region56: #{multi_output_lstm.1} parent=1 // pred_region
      %2215 = vsyncadd [#allocation4], 0
      %s2217 = sshll.u32 [#allocation10], 4
      %s2218 = int_to_ptr.vmem [resolvable:$true] %s2217
      %s2219 = sshll.u32 %s9, 4
      %s2220 = int_to_ptr.hbm [resolvable:$true] %s2219
      %2222 = dma.vmem_to_hbm [thread:$0]  %s2218, 32, %s2220, [#allocation4]
    $region57: #{multi_output_lstm.1} parent=1 // pred_fallthru
      _
    // Predicated region
    $region58: #{multi_output_lstm.1} parent=1 // pred_check
      _
    $region59: #{multi_output_lstm.1} parent=1 // pred_check_branch
      %2224 = sbr.rel (0) target = $region61
    $region60: #{multi_output_lstm.1} parent=1 // pred_region
      %2226 = dma.done [#allocation4], 32
    $region61: #{multi_output_lstm.1} parent=1 // pred_fallthru
      _
    %2227 = vsyncpa [#allocation3], 1
    %2228 = vsyncpa [#allocation6], 1
    %2229 = vsyncpa [#allocation9], 1
    %2230 = vsyncpa [#allocation4], 1

</llo_original>
